<compile_context>
chip_gen: v7x
topology: tpu7x:2x2x1
jax: 0.10.0
libtpu: 0.0.40
codegen_flags: <defaults>
</compile_context>

<pallas_src>
import math
import functools

import numpy as np
import jax
import jax.numpy as jnp
from jax.experimental import pallas as pl
from jax.experimental.pallas import tpu as pltpu


def gaussian_1d(window_size: int, sigma: float):
    """Same as PyTorch `gaussian(...)`: normalized 1D Gaussian taps."""
    g = [math.exp(-((x - window_size // 2) ** 2) / (2.0 * sigma ** 2))
         for x in range(window_size)]
    s = sum(g)
    return [v / s for v in g]


def _band_matrix(n: int, taps, window_size: int) -> np.ndarray:
    """Banded (n, n) matrix G with G[i + dx - p, i] = taps[dx] (zero-padded conv).

    x @ G  == 1D 'same' cross-correlation of each row of x with `taps`
    G @ x  == 1D 'same' cross-correlation of each column of x with `taps`
    (G is symmetric Toeplitz since the Gaussian is symmetric.)
    """
    p = window_size // 2
    m = np.zeros((n, n), np.float32)
    for i in range(n):
        for dx in range(window_size):
            j = i + dx - p
            if 0 <= j < n:
                m[j, i] += taps[dx]
    return m


def _block_diag_band(n: int, taps, window_size: int, copies: int) -> np.ndarray:
    """Block-diagonal stack of `copies` banded (n, n) Gaussian matrices.

    Left-multiplying a (copies*n, W) slab of row-stacked images applies the
    per-image column conv with zero padding exactly (no cross-image leakage).
    """
    g = _band_matrix(n, taps, window_size)
    if copies == 1:
        return g
    return np.kron(np.eye(copies, dtype=np.float32), g)


def _ceil_to(v: int, m: int) -> int:
    return -(-v // m) * m


def _vmem_capacity_bytes() -> int:
    """Per-core VMEM capacity (v5e/v6e: 128 MiB, v7x: 64 MiB), with fallback."""
    try:
        return int(pltpu.get_tpu_info().vmem_capacity_bytes)
    except Exception:
        return 64 * 1024 * 1024  # conservative (v7x per-TensorCore VMEM)


def _pick_block_images(BC: int, H: int, W: int, in_itemsize: int,
                       budget_bytes: int, k_cap: int = 512) -> int:
    """Largest divisor TB of BC such that:
       * the per-step VMEM footprint (incl. double-buffered inputs, the
         lane-padded f32 temporaries, and the Gw/Ghb constants) fits `budget`,
       * TB*H <= k_cap (bounds Ghb size and column-conv MXU waste),
       * NB = BC/TB stays >= 2 when BC >= 2 (so v7x can use both TensorCores).
    """
    Wp = _ceil_to(W, 128)
    Hp = _ceil_to(H, 8)

    def footprint(tb):
        m = tb * H
        inputs = 2 * 2 * tb * Hp * Wp * in_itemsize          # x1/x2, double-buffered
        temps = 28 * m * Wp * 4                               # stack/rowc/conv/SSIM f32 temps
        ghb = 2 * _ceil_to(m, 8) * _ceil_to(m, 128) * 4       # constant (still 2-buffered)
        gwb = 2 * _ceil_to(W, 8) * Wp * 4
        outb = 2 * 8 * 128 * 4
        return inputs + temps + ghb + gwb + outb

    best = 1
    for d in range(1, BC + 1):
        if BC % d:
            continue
        if BC >= 2 and BC // d < 2:          # keep NB >= 2 for v7x megacore
            continue
        if d * H > k_cap:
            continue
        if footprint(d) > budget_bytes:
            continue
        best = d
    return best


def _ssim_kernel(x1_ref, x2_ref, ghb_ref, gw_ref, out_ref, stack_ref, *, TB, H, W):
    M = TB * H
    # (TB, H, W) block, cast to f32 in-kernel (HBM DMA stays in native dtype).
    x1 = x1_ref[...].astype(jnp.float32).reshape(M, W)
    x2 = x2_ref[...].astype(jnp.float32).reshape(M, W)

    # Write the five conv operands straight into one VMEM scratch slab
    # (no jnp.concatenate copy, fewer live image-sized temporaries).
    stack_ref[0] = x1
    stack_ref[1] = x2
    stack_ref[2] = x1 * x1
    stack_ref[3] = x2 * x2
    stack_ref[4] = x1 * x2

    gw = gw_ref[...]        # (W, W)   banded Gaussian, row conv
    ghb = ghb_ref[...]      # (M, M)   block-diag banded Gaussian, column conv

    # Row conv on the MXU: one (5M, W) @ (W, W) matmul (Gw loaded once).
    rowc = jnp.dot(stack_ref[...].reshape(5 * M, W), gw,
                   preferred_element_type=jnp.float32)          # (5M, W)

    # Column conv on the MXU: 5 plain 2-D matmuls sharing the SAME (M, M)
    # block-diagonal operand — no broadcast_to, no per-image weight reload.
    conv = [jnp.dot(ghb, rowc[o * M:(o + 1) * M, :],
                    preferred_element_type=jnp.float32) for o in range(5)]
    mu1, mu2, s11, s22, s12 = conv

    mu1_sq = mu1 * mu1
    mu2_sq = mu2 * mu2
    mu1_mu2 = mu1 * mu2
    sigma1_sq = s11 - mu1_sq
    sigma2_sq = s22 - mu2_sq
    sigma12 = s12 - mu1_mu2

    C1 = 0.01 ** 2
    C2 = 0.03 ** 2
    num = (2.0 * mu1_mu2 + C1) * (2.0 * sigma12 + C2)
    den = (mu1_sq + mu2_sq + C1) * (sigma1_sq + sigma2_sq + C2)
    ssim_map = num / den                   # exact divide (keeps 1e-4 tolerance)

    # Per-program partial sum, broadcast into a lane-dense (1, 8, 128) tile.
    block_sum = jnp.sum(ssim_map)
    out_ref[...] = jnp.zeros((1, 8, 128), jnp.float32) + block_sum


def ssim_loss_pallas(img1, img2, window_size: int = 11, sigma: float = 1.5):
    """1 - SSIM(img1, img2), matching SsimLoss.forward with size_average=True."""
    B, C, H, W = img1.shape
    BC = B * C

    # Reshape only (free for contiguous NCHW): no pad, no cast in HBM.
    x1 = img1.reshape(BC, H, W)
    x2 = img2.reshape(BC, H, W)

    g = gaussian_1d(window_size, sigma)

    # Generation-aware VMEM sizing (v5e/v6e 128 MiB, v7x 64 MiB).
    cap = _vmem_capacity_bytes()
    budget = int(cap * 0.55)
    vmem_limit = int(cap * 0.75)

    itemsize = jnp.dtype(img1.dtype).itemsize
    TB = _pick_block_images(BC, H, W, itemsize, budget)
    NB = BC // TB
    M = TB * H

    gw = jnp.asarray(_band_matrix(W, g, window_size))              # (W, W)
    ghb = jnp.asarray(_block_diag_band(H, g, window_size, TB))     # (M, M)

    kernel = functools.partial(_ssim_kernel, TB=TB, H=H, W=W)

    out = pl.pallas_call(
        kernel,
        out_shape=jax.ShapeDtypeStruct((NB, 8, 128), jnp.float32),
        grid_spec=pltpu.PrefetchScalarGridSpec(
            num_scalar_prefetch=0,
            grid=(NB,),
            in_specs=[
                pl.BlockSpec((TB, H, W), lambda i: (i, 0, 0)),
                pl.BlockSpec((TB, H, W), lambda i: (i, 0, 0)),
                pl.BlockSpec((M, M), lambda i: (0, 0)),     # constant index_map:
                pl.BlockSpec((W, W), lambda i: (0, 0)),     #   DMA'd once, not per step
            ],
            out_specs=pl.BlockSpec((1, 8, 128), lambda i: (i, 0, 0)),
            scratch_shapes=[pltpu.VMEM((5, M, W), jnp.float32)],
        ),
        compiler_params=pltpu.CompilerParams(
            dimension_semantics=("parallel",),       # shards grid over v7x's 2 TCs
            vmem_limit_bytes=vmem_limit,
        ),
    )(x1, x2, ghb, gw)

    total = jnp.sum(out[:, 0, 0])
    return 1.0 - total / (BC * H * W)


def ssim_loss_ref(img1, img2, window_size: int = 11, sigma: float = 1.5):
    """Pure-JAX reference (full 2D window), mirrors the PyTorch _ssim math."""
    B, C, H, W = img1.shape
    p = window_size // 2
    g = jnp.asarray(gaussian_1d(window_size, sigma), jnp.float32)
    w2d = jnp.outer(g, g)

    def conv(x):
        xp = jnp.pad(x, ((0, 0), (0, 0), (p, p), (p, p)))
        out = jnp.zeros_like(x)
        for dy in range(window_size):
            for dx in range(window_size):
                out = out + w2d[dy, dx] * xp[:, :, dy:dy + H, dx:dx + W]
        return out

    img1 = img1.astype(jnp.float32)
    img2 = img2.astype(jnp.float32)
    mu1, mu2 = conv(img1), conv(img2)
    mu1_sq, mu2_sq, mu1_mu2 = mu1 * mu1, mu2 * mu2, mu1 * mu2
    sigma1_sq = conv(img1 * img1) - mu1_sq
    sigma2_sq = conv(img2 * img2) - mu2_sq
    sigma12 = conv(img1 * img2) - mu1_mu2
    C1, C2 = 0.01 ** 2, 0.03 ** 2
    ssim_map = ((2 * mu1_mu2 + C1) * (2 * sigma12 + C2)) / (
        (mu1_sq + mu2_sq + C1) * (sigma1_sq + sigma2_sq + C2))
    return 1.0 - jnp.mean(ssim_map)


if __name__ == "__main__":
    key = jax.random.PRNGKey(0)
    k1, k2 = jax.random.split(key)
    B, C, H, W = 2, 4, 16, 16
    img1 = jax.random.uniform(k1, (B, C, H, W), dtype=jnp.float32)
    img2 = jax.random.uniform(k2, (B, C, H, W), dtype=jnp.float32)

    loss = jax.block_until_ready(ssim_loss_pallas(img1, img2))
    loss_ref = jax.block_until_ready(ssim_loss_ref(img1, img2))

    assert jnp.isfinite(loss), "non-finite loss"
    assert abs(float(loss) - float(loss_ref)) < 2e-4, (float(loss), float(loss_ref))
    print("KERNEL_OK")
</pallas_src>

<mosaic_0001>
module attributes {stable_mosaic.version = 11 : i64} {
  func.func @_ssim_kernel(%arg0: i32, %arg1: memref<4x16x16xf32, #tpu.memory_space<vmem>>, %arg2: memref<4x16x16xf32, #tpu.memory_space<vmem>>, %arg3: memref<64x64xf32, #tpu.memory_space<vmem>>, %arg4: memref<16x16xf32, #tpu.memory_space<vmem>>, %arg5: memref<1x8x128xf32, #tpu.memory_space<vmem>>, %arg6: memref<5x64x16xf32, #tpu.memory_space<vmem>>) attributes {dimension_semantics = [#tpu.dimension_semantics<parallel>], iteration_bounds = array<i64: 2>, scalar_prefetch = 0 : i64, scratch_operands = 1 : i64, tpu.core_type = #tpu.core_type<tc>, window_params = [{transform_indices = @transform_0, window_bounds = array<i64: 4, 16, 16>}, {transform_indices = @transform_1, window_bounds = array<i64: 4, 16, 16>}, {pipeline_mode = #tpu.pipeline_mode<synchronous>, transform_indices = @transform_2, window_bounds = array<i64: 64, 64>}, {pipeline_mode = #tpu.pipeline_mode<synchronous>, transform_indices = @transform_3, window_bounds = array<i64: 16, 16>}, {transform_indices = @transform_4, window_bounds = array<i64: 1, 8, 128>}]} {
    %c0 = arith.constant 0 : index
    %c0_0 = arith.constant 0 : index
    %c0_1 = arith.constant 0 : index
    %0 = vector.load %arg1[%c0, %c0_0, %c0_1] : memref<4x16x16xf32, #tpu.memory_space<vmem>>, vector<4x16x16xf32>
    %1 = vector.shape_cast %0 : vector<4x16x16xf32> to vector<64x16xf32>
    %c0_2 = arith.constant 0 : index
    %c0_3 = arith.constant 0 : index
    %c0_4 = arith.constant 0 : index
    %2 = vector.load %arg2[%c0_2, %c0_3, %c0_4] : memref<4x16x16xf32, #tpu.memory_space<vmem>>, vector<4x16x16xf32>
    %3 = vector.shape_cast %2 : vector<4x16x16xf32> to vector<64x16xf32>
    %c0_5 = arith.constant 0 : index
    %c0_6 = arith.constant 0 : index
    %c0_7 = arith.constant 0 : index
    %4 = vector.load %arg6[%c0_5, %c0_6, %c0_7] : memref<5x64x16xf32, #tpu.memory_space<vmem>>, vector<1x64x16xf32>
    %5 = vector.shape_cast %4 : vector<1x64x16xf32> to vector<64x16xf32>
    %6 = vector.shape_cast %1 : vector<64x16xf32> to vector<1x64x16xf32>
    tpu.vector_store %arg6[%c0_5, %c0_6, %c0_7], %6 {strides = array<i32>} : memref<5x64x16xf32, #tpu.memory_space<vmem>>, vector<1x64x16xf32>,
    %c1 = arith.constant 1 : index
    %c0_8 = arith.constant 0 : index
    %c0_9 = arith.constant 0 : index
    %7 = vector.load %arg6[%c1, %c0_8, %c0_9] : memref<5x64x16xf32, #tpu.memory_space<vmem>>, vector<1x64x16xf32>
    %8 = vector.shape_cast %7 : vector<1x64x16xf32> to vector<64x16xf32>
    %9 = vector.shape_cast %3 : vector<64x16xf32> to vector<1x64x16xf32>
    tpu.vector_store %arg6[%c1, %c0_8, %c0_9], %9 {strides = array<i32>} : memref<5x64x16xf32, #tpu.memory_space<vmem>>, vector<1x64x16xf32>,
    %10 = arith.mulf %1, %1 : vector<64x16xf32>
    %c2 = arith.constant 2 : index
    %c0_10 = arith.constant 0 : index
    %c0_11 = arith.constant 0 : index
    %11 = vector.load %arg6[%c2, %c0_10, %c0_11] : memref<5x64x16xf32, #tpu.memory_space<vmem>>, vector<1x64x16xf32>
    %12 = vector.shape_cast %11 : vector<1x64x16xf32> to vector<64x16xf32>
    %13 = vector.shape_cast %10 : vector<64x16xf32> to vector<1x64x16xf32>
    tpu.vector_store %arg6[%c2, %c0_10, %c0_11], %13 {strides = array<i32>} : memref<5x64x16xf32, #tpu.memory_space<vmem>>, vector<1x64x16xf32>,
    %14 = arith.mulf %3, %3 : vector<64x16xf32>
    %c3 = arith.constant 3 : index
    %c0_12 = arith.constant 0 : index
    %c0_13 = arith.constant 0 : index
    %15 = vector.load %arg6[%c3, %c0_12, %c0_13] : memref<5x64x16xf32, #tpu.memory_space<vmem>>, vector<1x64x16xf32>
    %16 = vector.shape_cast %15 : vector<1x64x16xf32> to vector<64x16xf32>
    %17 = vector.shape_cast %14 : vector<64x16xf32> to vector<1x64x16xf32>
    tpu.vector_store %arg6[%c3, %c0_12, %c0_13], %17 {strides = array<i32>} : memref<5x64x16xf32, #tpu.memory_space<vmem>>, vector<1x64x16xf32>,
    %18 = arith.mulf %1, %3 : vector<64x16xf32>
    %c4 = arith.constant 4 : index
    %c0_14 = arith.constant 0 : index
    %c0_15 = arith.constant 0 : index
    %19 = vector.load %arg6[%c4, %c0_14, %c0_15] : memref<5x64x16xf32, #tpu.memory_space<vmem>>, vector<1x64x16xf32>
    %20 = vector.shape_cast %19 : vector<1x64x16xf32> to vector<64x16xf32>
    %21 = vector.shape_cast %18 : vector<64x16xf32> to vector<1x64x16xf32>
    tpu.vector_store %arg6[%c4, %c0_14, %c0_15], %21 {strides = array<i32>} : memref<5x64x16xf32, #tpu.memory_space<vmem>>, vector<1x64x16xf32>,
    %c0_16 = arith.constant 0 : index
    %c0_17 = arith.constant 0 : index
    %22 = vector.load %arg4[%c0_16, %c0_17] : memref<16x16xf32, #tpu.memory_space<vmem>>, vector<16x16xf32>
    %c0_18 = arith.constant 0 : index
    %c0_19 = arith.constant 0 : index
    %23 = vector.load %arg3[%c0_18, %c0_19] : memref<64x64xf32, #tpu.memory_space<vmem>>, vector<64x64xf32>
    %c0_20 = arith.constant 0 : index
    %c0_21 = arith.constant 0 : index
    %c0_22 = arith.constant 0 : index
    %24 = vector.load %arg6[%c0_20, %c0_21, %c0_22] : memref<5x64x16xf32, #tpu.memory_space<vmem>>, vector<5x64x16xf32>
    %25 = vector.shape_cast %24 : vector<5x64x16xf32> to vector<320x16xf32>
    %cst = arith.constant dense<0.000000e+00> : vector<320x16xf32>
    %26 = tpu.matmul %25, %22, %cst {dimension_numbers = #tpu.dot_dimension_numbers<[1], [0], [0], [1], [0, 0, 1, 1], [], []>} : vector<320x16xf32>, vector<16x16xf32>, vector<320x16xf32> -> vector<320x16xf32>
    %27 = vector.extract_strided_slice %26 {offsets = [0, 0], sizes = [64, 16], strides = [1, 1]} : vector<320x16xf32> to vector<64x16xf32>
    %cst_23 = arith.constant dense<0.000000e+00> : vector<64x16xf32>
    %28 = tpu.matmul %23, %27, %cst_23 {dimension_numbers = #tpu.dot_dimension_numbers<[1], [0], [0], [1], [0, 0, 1, 1], [], []>} : vector<64x64xf32>, vector<64x16xf32>, vector<64x16xf32> -> vector<64x16xf32>
    %29 = vector.extract_strided_slice %26 {offsets = [64, 0], sizes = [64, 16], strides = [1, 1]} : vector<320x16xf32> to vector<64x16xf32>
    %cst_24 = arith.constant dense<0.000000e+00> : vector<64x16xf32>
    %30 = tpu.matmul %23, %29, %cst_24 {dimension_numbers = #tpu.dot_dimension_numbers<[1], [0], [0], [1], [0, 0, 1, 1], [], []>} : vector<64x64xf32>, vector<64x16xf32>, vector<64x16xf32> -> vector<64x16xf32>
    %31 = vector.extract_strided_slice %26 {offsets = [128, 0], sizes = [64, 16], strides = [1, 1]} : vector<320x16xf32> to vector<64x16xf32>
    %cst_25 = arith.constant dense<0.000000e+00> : vector<64x16xf32>
    %32 = tpu.matmul %23, %31, %cst_25 {dimension_numbers = #tpu.dot_dimension_numbers<[1], [0], [0], [1], [0, 0, 1, 1], [], []>} : vector<64x64xf32>, vector<64x16xf32>, vector<64x16xf32> -> vector<64x16xf32>
    %33 = vector.extract_strided_slice %26 {offsets = [192, 0], sizes = [64, 16], strides = [1, 1]} : vector<320x16xf32> to vector<64x16xf32>
    %cst_26 = arith.constant dense<0.000000e+00> : vector<64x16xf32>
    %34 = tpu.matmul %23, %33, %cst_26 {dimension_numbers = #tpu.dot_dimension_numbers<[1], [0], [0], [1], [0, 0, 1, 1], [], []>} : vector<64x64xf32>, vector<64x16xf32>, vector<64x16xf32> -> vector<64x16xf32>
    %35 = vector.extract_strided_slice %26 {offsets = [256, 0], sizes = [64, 16], strides = [1, 1]} : vector<320x16xf32> to vector<64x16xf32>
    %cst_27 = arith.constant dense<0.000000e+00> : vector<64x16xf32>
    %36 = tpu.matmul %23, %35, %cst_27 {dimension_numbers = #tpu.dot_dimension_numbers<[1], [0], [0], [1], [0, 0, 1, 1], [], []>} : vector<64x64xf32>, vector<64x16xf32>, vector<64x16xf32> -> vector<64x16xf32>
    %37 = arith.mulf %28, %28 : vector<64x16xf32>
    %38 = arith.mulf %30, %30 : vector<64x16xf32>
    %39 = arith.mulf %28, %30 : vector<64x16xf32>
    %40 = arith.subf %32, %37 : vector<64x16xf32>
    %41 = arith.subf %34, %38 : vector<64x16xf32>
    %42 = arith.subf %36, %39 : vector<64x16xf32>
    %cst_28 = arith.constant 2.000000e+00 : f32
    %43 = vector.broadcast %cst_28 : f32 to vector<64x16xf32>
    %44 = arith.mulf %43, %39 : vector<64x16xf32>
    %cst_29 = arith.constant 9.99999974E-5 : f32
    %45 = vector.broadcast %cst_29 : f32 to vector<64x16xf32>
    %46 = arith.addf %44, %45 : vector<64x16xf32>
    %cst_30 = arith.constant 2.000000e+00 : f32
    %47 = vector.broadcast %cst_30 : f32 to vector<64x16xf32>
    %48 = arith.mulf %47, %42 : vector<64x16xf32>
    %cst_31 = arith.constant 8.99999984E-4 : f32
    %49 = vector.broadcast %cst_31 : f32 to vector<64x16xf32>
    %50 = arith.addf %48, %49 : vector<64x16xf32>
    %51 = arith.mulf %46, %50 : vector<64x16xf32>
    %52 = arith.addf %37, %38 : vector<64x16xf32>
    %cst_32 = arith.constant 9.99999974E-5 : f32
    %53 = vector.broadcast %cst_32 : f32 to vector<64x16xf32>
    %54 = arith.addf %52, %53 : vector<64x16xf32>
    %55 = arith.addf %40, %41 : vector<64x16xf32>
    %cst_33 = arith.constant 8.99999984E-4 : f32
    %56 = vector.broadcast %cst_33 : f32 to vector<64x16xf32>
    %57 = arith.addf %55, %56 : vector<64x16xf32>
    %58 = arith.mulf %54, %57 : vector<64x16xf32>
    %59 = arith.divf %51, %58 : vector<64x16xf32>
    %60 = vector.shape_cast %59 : vector<64x16xf32> to vector<1x64x16xf32>
    %cst_34 = arith.constant dense<0.000000e+00> : vector<1xf32>
    %61 = vector.multi_reduction <add>, %60, %cst_34 [1, 2] : vector<1x64x16xf32> to vector<1xf32>
    %62 = vector.shape_cast %61 : vector<1xf32> to vector<1x1x1xf32>
    %63 = vector.extract %62[0, 0, 0] : f32 from vector<1x1x1xf32>
    %cst_35 = arith.constant 0.000000e+00 : f32
    %64 = vector.broadcast %cst_35 : f32 to vector<1x8x128xf32>
    %65 = vector.broadcast %63 : f32 to vector<1x8x128xf32>
    %66 = arith.addf %64, %65 : vector<1x8x128xf32>
    %c0_36 = arith.constant 0 : index
    %c0_37 = arith.constant 0 : index
    %c0_38 = arith.constant 0 : index
    %67 = vector.load %arg5[%c0_36, %c0_37, %c0_38] : memref<1x8x128xf32, #tpu.memory_space<vmem>>, vector<1x8x128xf32>
    tpu.vector_store %arg5[%c0_36, %c0_37, %c0_38], %66 {strides = array<i32>} : memref<1x8x128xf32, #tpu.memory_space<vmem>>, vector<1x8x128xf32>,
    return
  }
  func.func @transform_0(%arg0: i32) -> (i32, i32, i32) {
    %c0_i32 = arith.constant 0 : i32
    %c0_i32_0 = arith.constant 0 : i32
    %c0_i32_1 = arith.constant 0 : i32
    return %arg0, %c0_i32, %c0_i32_0 : i32, i32, i32
  }
  func.func @transform_1(%arg0: i32) -> (i32, i32, i32) {
    %c0_i32 = arith.constant 0 : i32
    %c0_i32_0 = arith.constant 0 : i32
    %c0_i32_1 = arith.constant 0 : i32
    return %arg0, %c0_i32, %c0_i32_0 : i32, i32, i32
  }
  func.func @transform_2(%arg0: i32) -> (i32, i32) {
    %c0_i32 = arith.constant 0 : i32
    %c0_i32_0 = arith.constant 0 : i32
    %c0_i32_1 = arith.constant 0 : i32
    return %c0_i32, %c0_i32_0 : i32, i32
  }
  func.func @transform_3(%arg0: i32) -> (i32, i32) {
    %c0_i32 = arith.constant 0 : i32
    %c0_i32_0 = arith.constant 0 : i32
    %c0_i32_1 = arith.constant 0 : i32
    return %c0_i32, %c0_i32_0 : i32, i32
  }
  func.func @transform_4(%arg0: i32) -> (i32, i32, i32) {
    %c0_i32 = arith.constant 0 : i32
    %c0_i32_0 = arith.constant 0 : i32
    %c0_i32_1 = arith.constant 0 : i32
    return %arg0, %c0_i32, %c0_i32_0 : i32, i32, i32
  }
}

</mosaic_0001>

<llo_original>
// kernel: tpu_custom_call.1
$region0: #{tpu_custom_call.1}
  #allocation0 [shape = 'u32[]', space=smem, size = 0x4, offset = 0x4, fixed_abs, tag = 'smem constant byte address 0x4 - core index']
  #allocation1 [shape = 'u32[144,128]{1,0:T(1,128)}', space=vmem, size = 0x12000, scoped, tag = 'internal scratch']
  #allocation2 [shape = 'f32[5,64,16]{2,1,0:T(8,128)}', space=vmem, size = 0x28000, scoped, tag = 'scratch operand']
  %s0 = inlined_call_operand.hbm [shape: f32[8,16,16], index: 0, kind: input, shape index: {}]
  %s1 = inlined_call_operand.hbm [shape: f32[8,16,16], index: 1, kind: input, shape index: {}]
  %s2 = inlined_call_operand.hbm [shape: f32[64,64], index: 2, kind: input, shape index: {}]
  %s3 = inlined_call_operand.hbm [shape: f32[16,16], index: 3, kind: input, shape index: {}]
  %s4 = inlined_call_operand.hbm [shape: f32[2,8,128], index: 4, kind: output, shape index: {}]
  %s5 = sld [smem:[#allocation0]]
  $region65: #{tpu_custom_call.1} parent=0
    _
  %s7 = ssub.s32 1, %s5
  %s8 = scalar_select 0, %s7, %s5
  $region1: #{tpu_custom_call.1} parent=0
    #allocation3 [shape = 'u8[65536]{0}', space=vmem, size = 0x10000, scoped, tag = 'input window, operand 0']
    #allocation4 [shape = 's32[2]{0}', space=sflag, size = 0x8, scoped, tag = 'scoped memory for tpu_custom_call.1']
    #allocation5 [shape = 's32[2]{0}', space=sflag, size = 0x8, scoped, tag = 'scoped memory for tpu_custom_call.1']
    #allocation6 [shape = 'u8[65536]{0}', space=vmem, size = 0x10000, scoped, tag = 'input window, operand 1']
    #allocation7 [shape = 's32[2]{0}', space=sflag, size = 0x8, scoped, tag = 'scoped memory for tpu_custom_call.1']
    #allocation8 [shape = 'u8[32768]{0}', space=vmem, size = 0x8000, scoped, tag = 'input window, operand 2, single buffered']
    #allocation9 [shape = 'u8[8192]{0}', space=vmem, size = 0x2000, scoped, tag = 'input window, operand 3, single buffered']
    #allocation10 [shape = 's32[1]{0}', space=sflag, size = 0x4, scoped, tag = 'scoped memory for tpu_custom_call.1']
    #allocation11 [shape = 'u8[8192]{0}', space=vmem, size = 0x2000, scoped, tag = 'output window, operand 0']
    %9 = vsyncpa [#allocation4], 0
    %s10 = scalar_lea.sflag [#allocation4], 1
    %11 = vsyncpa %s10, 0
    %12 = vsyncpa [#allocation7], 0
    %s13 = scalar_lea.sflag [#allocation7], 1
    %14 = vsyncpa %s13, 0
    %15 = vsyncpa [#allocation10], 0
    %16 = vsyncpa [#allocation5], 0
    %s17 = scalar_lea.sflag [#allocation5], 1
    %18 = vsyncpa %s17, 0
    loop: start=0, step=1, limit=4
    $region2: #{tpu_custom_call.1} parent=1 // loop_pre_header
      _
    $region3: #{tpu_custom_call.1} parent=1 // loop_header
      %s20 = sphi 0, %s24
      %p21 = scmp.ge.s32.totalorder %s20, 4
      %s30 = sphi 0, %s32
      %s33 = sphi 0, %s30
      %s34 = sphi 0, %s33
      %s50 = sphi 0, %s34
      %s56 = sphi 0, %s58
      %s59 = sphi 0, %s56
      %s60 = sphi 0, %s59
      %s76 = sphi 0, %s60
      %s80 = sphi 0, %s80
      %s82 = sphi 0, %s80
      %s83 = sphi 0, %s82
      %s97 = sphi 0, %s83
      %s101 = sphi 0, %s101
      %s103 = sphi 0, %s101
      %s104 = sphi 0, %s103
      %s118 = sphi 0, %s104
      %s124 = sphi 0, %s126
      %s127 = sphi 0, %s124
      %s128 = sphi 0, %s127
      %s144 = sphi 0, %s128
    $region4: #{tpu_custom_call.1} parent=1 // loop_header_branch
      %23 = sbr.rel (%p21) target = $region8
    $region5: #{tpu_custom_call.1} parent=1 // loop_body
      %s25 = ssub.s32 %s20, 1
      %s26 = ssub.s32 %s20, 2
      %s27 = sadd.s32 %s20, 1
      %s28 = ssub.s32 %s20, %s27
      %p29 = scmp.eq.s32.totalorder %s28, 0
      %s31 = sadd.s32 %s30, 1
      %s32 = scalar_select %p29, %s30, %s31
      %p35 = pneg %p29
      %p36 = scmp.eq.s32.totalorder %s20, 1
      %p37 = por %p35, %p36
      %p38 = scmp.ne.s32.totalorder %s30, %s33
      %p39 = scmp.eq.s32.totalorder %s20, 0
      %p40 = por %p38, %p39
      %p41 = scmp.ne.s32.totalorder %s30, %s33
      %p42 = scmp.eq.s32.totalorder %s25, 1
      %p43 = por %p41, %p42
      %p44 = scmp.ne.s32.totalorder %s33, %s34
      %p45 = scmp.eq.s32.totalorder %s25, 0
      %p46 = por %p44, %p45
      %p47 = scmp.ne.s32.totalorder %s33, %s34
      %p48 = scmp.eq.s32.totalorder %s26, 1
      %p49 = por %p47, %p48
      %p51 = scmp.ne.s32.totalorder %s34, %s50
      %p52 = scmp.eq.s32.totalorder %s26, 0
      %p53 = por %p51, %p52
      %s54 = ssub.s32 %s20, %s27
      %p55 = scmp.eq.s32.totalorder %s54, 0
      %s57 = sadd.s32 %s56, 1
      %s58 = scalar_select %p55, %s56, %s57
      %p61 = pneg %p55
      %p62 = scmp.eq.s32.totalorder %s20, 1
      %p63 = por %p61, %p62
      %p64 = scmp.ne.s32.totalorder %s56, %s59
      %p65 = scmp.eq.s32.totalorder %s20, 0
      %p66 = por %p64, %p65
      %p67 = scmp.ne.s32.totalorder %s56, %s59
      %p68 = scmp.eq.s32.totalorder %s25, 1
      %p69 = por %p67, %p68
      %p70 = scmp.ne.s32.totalorder %s59, %s60
      %p71 = scmp.eq.s32.totalorder %s25, 0
      %p72 = por %p70, %p71
      %p73 = scmp.ne.s32.totalorder %s59, %s60
      %p74 = scmp.eq.s32.totalorder %s26, 1
      %p75 = por %p73, %p74
      %p77 = scmp.ne.s32.totalorder %s60, %s76
      %p78 = scmp.eq.s32.totalorder %s26, 0
      %p79 = por %p77, %p78
      %s81 = sadd.s32 %s80, 1
      %p84 = scmp.eq.s32.totalorder %s20, 1
      %p85 = scmp.ne.s32.totalorder %s80, %s82
      %p86 = scmp.eq.s32.totalorder %s20, 0
      %p87 = por %p85, %p86
      %p88 = scmp.ne.s32.totalorder %s80, %s82
      %p89 = scmp.eq.s32.totalorder %s25, 1
      %p90 = por %p88, %p89
      %p91 = scmp.ne.s32.totalorder %s82, %s83
      %p92 = scmp.eq.s32.totalorder %s25, 0
      %p93 = por %p91, %p92
      %p94 = scmp.ne.s32.totalorder %s82, %s83
      %p95 = scmp.eq.s32.totalorder %s26, 1
      %p96 = por %p94, %p95
      %p98 = scmp.ne.s32.totalorder %s83, %s97
      %p99 = scmp.eq.s32.totalorder %s26, 0
      %p100 = por %p98, %p99
      %s102 = sadd.s32 %s101, 1
      %p105 = scmp.eq.s32.totalorder %s20, 1
      %p106 = scmp.ne.s32.totalorder %s101, %s103
      %p107 = scmp.eq.s32.totalorder %s20, 0
      %p108 = por %p106, %p107
      %p109 = scmp.ne.s32.totalorder %s101, %s103
      %p110 = scmp.eq.s32.totalorder %s25, 1
      %p111 = por %p109, %p110
      %p112 = scmp.ne.s32.totalorder %s103, %s104
      %p113 = scmp.eq.s32.totalorder %s25, 0
      %p114 = por %p112, %p113
      %p115 = scmp.ne.s32.totalorder %s103, %s104
      %p116 = scmp.eq.s32.totalorder %s26, 1
      %p117 = por %p115, %p116
      %p119 = scmp.ne.s32.totalorder %s104, %s118
      %p120 = scmp.eq.s32.totalorder %s26, 0
      %p121 = por %p119, %p120
      %s122 = ssub.s32 %s20, %s27
      %p123 = scmp.eq.s32.totalorder %s122, 0
      %s125 = sadd.s32 %s124, 1
      %s126 = scalar_select %p123, %s124, %s125
      %p129 = pneg %p123
      %p130 = scmp.eq.s32.totalorder %s20, 1
      %p131 = por %p129, %p130
      %p132 = scmp.ne.s32.totalorder %s124, %s127
      %p133 = scmp.eq.s32.totalorder %s20, 0
      %p134 = por %p132, %p133
      %p135 = scmp.ne.s32.totalorder %s124, %s127
      %p136 = scmp.eq.s32.totalorder %s25, 1
      %p137 = por %p135, %p136
      %p138 = scmp.ne.s32.totalorder %s127, %s128
      %p139 = scmp.eq.s32.totalorder %s25, 0
      %p140 = por %p138, %p139
      %p141 = scmp.ne.s32.totalorder %s127, %s128
      %p142 = scmp.eq.s32.totalorder %s26, 1
      %p143 = por %p141, %p142
      %p145 = scmp.ne.s32.totalorder %s128, %s144
      %p146 = scmp.eq.s32.totalorder %s26, 0
      %p147 = por %p145, %p146
      %p148 = scmp.le.s32.totalorder 1, %s20
      %p149 = scmp.lt.s32.totalorder %s20, 3
      %p150 = pnand %p148, %p149
      %p151 = pneg %p150
      // Predicated region
      $region9: #{tpu_custom_call.1} parent=5 // pred_check
        _
      $region10: #{tpu_custom_call.1} parent=5 // pred_check_branch
        %153 = sbr.rel (%p150) target = $region12
      $region11: #{tpu_custom_call.1} parent=5 // pred_region
        %s154 = ssub.s32 %s20, 1
        // Predicated region
        $region13: #{tpu_custom_call.1} parent=11 // pred_check
          %p155 = pneg %p93
        $region14: #{tpu_custom_call.1} parent=11 // pred_check_branch
          %157 = sbr.rel (%p155) target = $region16
        $region15: #{tpu_custom_call.1} parent=11 // pred_region
          %s159 = ssub.s32 1024, 1024
          %160 = vsyncadd [#allocation7], %s159
          %s161 = sshll.u32 [#allocation8], 4
          %s162 = int_to_ptr.vmem [resolvable:$true] %s161
          %167 = dma.hbm_to_vmem [thread:$0]  %s2, 1024, %s162, [#allocation7], 128, 128, 8
        $region16: #{tpu_custom_call.1} parent=11 // pred_fallthru
          _
        // Predicated region
        $region17: #{tpu_custom_call.1} parent=11 // pred_check
          %p168 = pneg %p114
        $region18: #{tpu_custom_call.1} parent=11 // pred_check_branch
          %170 = sbr.rel (%p168) target = $region20
        $region19: #{tpu_custom_call.1} parent=11 // pred_region
          %s172 = ssub.s32 256, 256
          %173 = vsyncadd [#allocation10], %s172
          %s174 = sshll.u32 [#allocation9], 4
          %s175 = int_to_ptr.vmem [resolvable:$true] %s174
          %180 = dma.hbm_to_vmem [thread:$0]  %s3, 256, %s175, [#allocation10], 128, 128, 8
        $region20: #{tpu_custom_call.1} parent=11 // pred_fallthru
          _
      $region12: #{tpu_custom_call.1} parent=5 // pred_fallthru
        _
      %p181 = scmp.lt.s32.totalorder %s20, 2
      // Predicated region
      $region21: #{tpu_custom_call.1} parent=5 // pred_check
        %p182 = pneg %p181
      $region22: #{tpu_custom_call.1} parent=5 // pred_check_branch
        %184 = sbr.rel (%p182) target = $region24
      $region23: #{tpu_custom_call.1} parent=5 // pred_region
        // Predicated region
        $region25: #{tpu_custom_call.1} parent=23 // pred_check
          %p185 = pneg %p40
        $region26: #{tpu_custom_call.1} parent=23 // pred_check_branch
          %187 = sbr.rel (%p185) target = $region28
        $region27: #{tpu_custom_call.1} parent=23 // pred_region
          %s188 = sand.u32 %s30, 1
          %s189 = scalar_lea.sflag [#allocation4], %s188
          %s190 = sand.u32 %s30, 1
          %s191 = smul.addr %s190, 64
          %s192 = scalar_lea.vmem [#allocation3], %s191
          %s193 = smul.u32 4, %s20
          %s195 = ssub.s32 1024, 1024
          %196 = vsyncadd %s189, %s195
          %s197 = smul.addr %s193, 2
          %s198 = smul.addr %s197, 128
          %s199 = scalar_lea.hbm %s0, %s198
          %s200 = sshll.u32 %s192, 4
          %s201 = int_to_ptr.vmem [resolvable:$true] %s200
          %206 = dma.hbm_to_vmem [thread:$0]  %s199, 1024, %s201, %s189, 128, 128, 8
        $region28: #{tpu_custom_call.1} parent=23 // pred_fallthru
          _
        // Predicated region
        $region29: #{tpu_custom_call.1} parent=23 // pred_check
          %p207 = pneg %p66
        $region30: #{tpu_custom_call.1} parent=23 // pred_check_branch
          %209 = sbr.rel (%p207) target = $region32
        $region31: #{tpu_custom_call.1} parent=23 // pred_region
          %s210 = sand.u32 %s20, 1
          %s211 = scalar_lea.sflag [#allocation7], %s210
          %s212 = sand.u32 %s56, 1
          %s213 = smul.addr %s212, 64
          %s214 = scalar_lea.vmem [#allocation6], %s213
          %s215 = smul.u32 4, %s20
          %s217 = ssub.s32 1024, 1024
          %218 = vsyncadd %s211, %s217
          %s219 = smul.addr %s215, 2
          %s220 = smul.addr %s219, 128
          %s221 = scalar_lea.hbm %s1, %s220
          %s222 = sshll.u32 %s214, 4
          %s223 = int_to_ptr.vmem [resolvable:$true] %s222
          %228 = dma.hbm_to_vmem [thread:$0]  %s221, 1024, %s223, %s211, 128, 128, 8
        $region32: #{tpu_custom_call.1} parent=23 // pred_fallthru
          _
      $region24: #{tpu_custom_call.1} parent=5 // pred_fallthru
        _
      %p229 = scmp.le.s32.totalorder 1, %s20
      %p230 = scmp.lt.s32.totalorder %s20, 3
      %p231 = pnand %p229, %p230
      %p232 = pneg %p231
      // Predicated region
      $region33: #{tpu_custom_call.1} parent=5 // pred_check
        _
      $region34: #{tpu_custom_call.1} parent=5 // pred_check_branch
        %234 = sbr.rel (%p231) target = $region36
      $region35: #{tpu_custom_call.1} parent=5 // pred_region
        %s235 = ssub.s32 %s20, 1
        %s236 = sand.u32 %s33, 1
        %s237 = scalar_lea.sflag [#allocation4], %s236
        %s238 = sand.u32 %s33, 1
        %s239 = smul.addr %s238, 64
        %s240 = scalar_lea.vmem [#allocation3], %s239
        // Predicated region
        $region37: #{tpu_custom_call.1} parent=35 // pred_check
          %p241 = pneg %p46
        $region38: #{tpu_custom_call.1} parent=35 // pred_check_branch
          %243 = sbr.rel (%p241) target = $region40
        $region39: #{tpu_custom_call.1} parent=35 // pred_region
          %244 = dma.done %s237, 1024
        $region40: #{tpu_custom_call.1} parent=35 // pred_fallthru
          _
        %s245 = sand.u32 %s25, 1
        %s246 = scalar_lea.sflag [#allocation7], %s245
        %s247 = sand.u32 %s59, 1
        %s248 = smul.addr %s247, 64
        %s249 = scalar_lea.vmem [#allocation6], %s248
        // Predicated region
        $region41: #{tpu_custom_call.1} parent=35 // pred_check
          %p250 = pneg %p72
        $region42: #{tpu_custom_call.1} parent=35 // pred_check_branch
          %252 = sbr.rel (%p250) target = $region44
        $region43: #{tpu_custom_call.1} parent=35 // pred_region
          %253 = dma.done %s246, 1024
        $region44: #{tpu_custom_call.1} parent=35 // pred_fallthru
          _
        // Predicated region
        $region45: #{tpu_custom_call.1} parent=35 // pred_check
          %p254 = pneg %p93
        $region46: #{tpu_custom_call.1} parent=35 // pred_check_branch
          %256 = sbr.rel (%p254) target = $region48
        $region47: #{tpu_custom_call.1} parent=35 // pred_region
          %257 = dma.done [#allocation7], 1024
        $region48: #{tpu_custom_call.1} parent=35 // pred_fallthru
          _
        // Predicated region
        $region49: #{tpu_custom_call.1} parent=35 // pred_check
          %p258 = pneg %p114
        $region50: #{tpu_custom_call.1} parent=35 // pred_check_branch
          %260 = sbr.rel (%p258) target = $region52
        $region51: #{tpu_custom_call.1} parent=35 // pred_region
          %261 = dma.done [#allocation10], 256
        $region52: #{tpu_custom_call.1} parent=35 // pred_fallthru
          _
        %s262 = sand.u32 %s33, 1
        %s263 = scalar_lea.sflag [#allocation4], %s262
        %s264 = sand.u32 %s33, 1
        %s265 = smul.addr %s264, 64
        %s266 = scalar_lea.vmem [#allocation3], %s265
        %p267 = pneg %p46
        %p268 = pneg %p43
        %s269 = sand.u32 %s25, 1
        %s270 = scalar_lea.sflag [#allocation7], %s269
        %s271 = sand.u32 %s59, 1
        %s272 = smul.addr %s271, 64
        %s273 = scalar_lea.vmem [#allocation6], %s272
        %p274 = pneg %p72
        %p275 = pneg %p69
        %p276 = pneg %p93
        %p277 = pneg %p90
        %p278 = pneg %p114
        %p279 = pneg %p111
        %p280 = pneg %p140
        %p281 = pneg %p137
        %s282 = sand.u32 %s127, 1
        %s283 = scalar_lea.sflag [#allocation5], %s282
        %s284 = sand.u32 %s127, 1
        %s285 = smul.addr %s284, 8
        %s286 = scalar_lea.vmem [#allocation11], %s285
        %s287 = smul.u32 4, %s25
        %s288 = smul.u32 4, %s25
        %v289 = vld [vmem:[%s240] sm:$0xff]
        %v290 = vld [vmem:[%s240 + $0x8] sm:$0xff]
        %v291 = vld [vmem:[%s240 + $0x10] sm:$0xff]
        %v292 = vld [vmem:[%s240 + $0x18] sm:$0xff]
        %v293 = vld [vmem:[%s240 + $0x20] sm:$0xff]
        %v294 = vld [vmem:[%s240 + $0x28] sm:$0xff]
        %v295 = vld [vmem:[%s240 + $0x30] sm:$0xff]
        %v296 = vld [vmem:[%s240 + $0x38] sm:$0xff]
        %v297 = vld [vmem:[%s249] sm:$0xff]
        %v298 = vld [vmem:[%s249 + $0x8] sm:$0xff]
        %v299 = vld [vmem:[%s249 + $0x10] sm:$0xff]
        %v300 = vld [vmem:[%s249 + $0x18] sm:$0xff]
        %v301 = vld [vmem:[%s249 + $0x20] sm:$0xff]
        %v302 = vld [vmem:[%s249 + $0x28] sm:$0xff]
        %v303 = vld [vmem:[%s249 + $0x30] sm:$0xff]
        %v304 = vld [vmem:[%s249 + $0x38] sm:$0xff]
        %vm305 = vcmask 130048
        %306 = vst.msk [vmem:[#allocation2] sm:$0xff] %vm305, %v289
        %307 = vst.msk [vmem:[#allocation2 + $0x8] sm:$0xff] %vm305, %v290
        %308 = vst.msk [vmem:[#allocation2 + $0x10] sm:$0xff] %vm305, %v291
        %309 = vst.msk [vmem:[#allocation2 + $0x18] sm:$0xff] %vm305, %v292
        %310 = vst.msk [vmem:[#allocation2 + $0x20] sm:$0xff] %vm305, %v293
        %311 = vst.msk [vmem:[#allocation2 + $0x28] sm:$0xff] %vm305, %v294
        %312 = vst.msk [vmem:[#allocation2 + $0x30] sm:$0xff] %vm305, %v295
        %313 = vst.msk [vmem:[#allocation2 + $0x38] sm:$0xff] %vm305, %v296
        %s314 = scalar_lea.vmem [#allocation2], 64
        %315 = vst.msk [vmem:[%s314] sm:$0xff] %vm305, %v297
        %316 = vst.msk [vmem:[%s314 + $0x8] sm:$0xff] %vm305, %v298
        %317 = vst.msk [vmem:[%s314 + $0x10] sm:$0xff] %vm305, %v299
        %318 = vst.msk [vmem:[%s314 + $0x18] sm:$0xff] %vm305, %v300
        %319 = vst.msk [vmem:[%s314 + $0x20] sm:$0xff] %vm305, %v301
        %320 = vst.msk [vmem:[%s314 + $0x28] sm:$0xff] %vm305, %v302
        %321 = vst.msk [vmem:[%s314 + $0x30] sm:$0xff] %vm305, %v303
        %322 = vst.msk [vmem:[%s314 + $0x38] sm:$0xff] %vm305, %v304
        %v323 = vmul.f32 %v289, %v289
        %v324 = vmul.f32 %v290, %v290
        %v325 = vmul.f32 %v291, %v291
        %v326 = vmul.f32 %v292, %v292
        %v327 = vmul.f32 %v293, %v293
        %v328 = vmul.f32 %v294, %v294
        %v329 = vmul.f32 %v295, %v295
        %v330 = vmul.f32 %v296, %v296
        %s331 = scalar_lea.vmem [#allocation2], 128
        %332 = vst.msk [vmem:[%s331] sm:$0xff] %vm305, %v323
        %333 = vst.msk [vmem:[%s331 + $0x8] sm:$0xff] %vm305, %v324
        %334 = vst.msk [vmem:[%s331 + $0x10] sm:$0xff] %vm305, %v325
        %335 = vst.msk [vmem:[%s331 + $0x18] sm:$0xff] %vm305, %v326
        %336 = vst.msk [vmem:[%s331 + $0x20] sm:$0xff] %vm305, %v327
        %337 = vst.msk [vmem:[%s331 + $0x28] sm:$0xff] %vm305, %v328
        %338 = vst.msk [vmem:[%s331 + $0x30] sm:$0xff] %vm305, %v329
        %339 = vst.msk [vmem:[%s331 + $0x38] sm:$0xff] %vm305, %v330
        %v340 = vmul.f32 %v297, %v297
        %v341 = vmul.f32 %v298, %v298
        %v342 = vmul.f32 %v299, %v299
        %v343 = vmul.f32 %v300, %v300
        %v344 = vmul.f32 %v301, %v301
        %v345 = vmul.f32 %v302, %v302
        %v346 = vmul.f32 %v303, %v303
        %v347 = vmul.f32 %v304, %v304
        %s348 = scalar_lea.vmem [#allocation2], 192
        %349 = vst.msk [vmem:[%s348] sm:$0xff] %vm305, %v340
        %350 = vst.msk [vmem:[%s348 + $0x8] sm:$0xff] %vm305, %v341
        %351 = vst.msk [vmem:[%s348 + $0x10] sm:$0xff] %vm305, %v342
        %352 = vst.msk [vmem:[%s348 + $0x18] sm:$0xff] %vm305, %v343
        %353 = vst.msk [vmem:[%s348 + $0x20] sm:$0xff] %vm305, %v344
        %354 = vst.msk [vmem:[%s348 + $0x28] sm:$0xff] %vm305, %v345
        %355 = vst.msk [vmem:[%s348 + $0x30] sm:$0xff] %vm305, %v346
        %356 = vst.msk [vmem:[%s348 + $0x38] sm:$0xff] %vm305, %v347
        %v357 = vmul.f32 %v289, %v297
        %v358 = vmul.f32 %v290, %v298
        %v359 = vmul.f32 %v291, %v299
        %v360 = vmul.f32 %v292, %v300
        %v361 = vmul.f32 %v293, %v301
        %v362 = vmul.f32 %v294, %v302
        %v363 = vmul.f32 %v295, %v303
        %v364 = vmul.f32 %v296, %v304
        %s365 = scalar_lea.vmem [#allocation2], 256
        %366 = vst.msk [vmem:[%s365] sm:$0xff] %vm305, %v357
        %367 = vst.msk [vmem:[%s365 + $0x8] sm:$0xff] %vm305, %v358
        %368 = vst.msk [vmem:[%s365 + $0x10] sm:$0xff] %vm305, %v359
        %369 = vst.msk [vmem:[%s365 + $0x18] sm:$0xff] %vm305, %v360
        %370 = vst.msk [vmem:[%s365 + $0x20] sm:$0xff] %vm305, %v361
        %371 = vst.msk [vmem:[%s365 + $0x28] sm:$0xff] %vm305, %v362
        %372 = vst.msk [vmem:[%s365 + $0x30] sm:$0xff] %vm305, %v363
        %373 = vst.msk [vmem:[%s365 + $0x38] sm:$0xff] %vm305, %v364
        %v374 = vld [vmem:[#allocation9] sm:$0xff]
        %v375 = vld [vmem:[#allocation9 + $0x8] sm:$0xff]
        %v376 = vld [vmem:[#allocation8] sm:$0xff]
        %v377 = vld [vmem:[#allocation8 + $0x8] sm:$0xff]
        %v378 = vld [vmem:[#allocation8 + $0x10] sm:$0xff]
        %v379 = vld [vmem:[#allocation8 + $0x18] sm:$0xff]
        %v380 = vld [vmem:[#allocation8 + $0x20] sm:$0xff]
        %v381 = vld [vmem:[#allocation8 + $0x28] sm:$0xff]
        %v382 = vld [vmem:[#allocation8 + $0x30] sm:$0xff]
        %v383 = vld [vmem:[#allocation8 + $0x38] sm:$0xff]
        %v384 = vld [vmem:[#allocation2] sm:$0xff]
        %v385 = vld [vmem:[#allocation2 + $0x8] sm:$0xff]
        %v386 = vld [vmem:[#allocation2 + $0x10] sm:$0xff]
        %v387 = vld [vmem:[#allocation2 + $0x18] sm:$0xff]
        %v388 = vld [vmem:[#allocation2 + $0x20] sm:$0xff]
        %v389 = vld [vmem:[#allocation2 + $0x28] sm:$0xff]
        %v390 = vld [vmem:[#allocation2 + $0x30] sm:$0xff]
        %v391 = vld [vmem:[#allocation2 + $0x38] sm:$0xff]
        %v392 = vld [vmem:[#allocation2 + $0x40] sm:$0xff]
        %v393 = vld [vmem:[#allocation2 + $0x48] sm:$0xff]
        %v394 = vld [vmem:[#allocation2 + $0x50] sm:$0xff]
        %v395 = vld [vmem:[#allocation2 + $0x58] sm:$0xff]
        %v396 = vld [vmem:[#allocation2 + $0x60] sm:$0xff]
        %v397 = vld [vmem:[#allocation2 + $0x68] sm:$0xff]
        %v398 = vld [vmem:[#allocation2 + $0x70] sm:$0xff]
        %v399 = vld [vmem:[#allocation2 + $0x78] sm:$0xff]
        %v400 = vld [vmem:[#allocation2 + $0x80] sm:$0xff]
        %v401 = vld [vmem:[#allocation2 + $0x88] sm:$0xff]
        %v402 = vld [vmem:[#allocation2 + $0x90] sm:$0xff]
        %v403 = vld [vmem:[#allocation2 + $0x98] sm:$0xff]
        %v404 = vld [vmem:[#allocation2 + $0xa0] sm:$0xff]
        %v405 = vld [vmem:[#allocation2 + $0xa8] sm:$0xff]
        %v406 = vld [vmem:[#allocation2 + $0xb0] sm:$0xff]
        %v407 = vld [vmem:[#allocation2 + $0xb8] sm:$0xff]
        %v408 = vld [vmem:[#allocation2 + $0xc0] sm:$0xff]
        %v409 = vld [vmem:[#allocation2 + $0xc8] sm:$0xff]
        %v410 = vld [vmem:[#allocation2 + $0xd0] sm:$0xff]
        %v411 = vld [vmem:[#allocation2 + $0xd8] sm:$0xff]
        %v412 = vld [vmem:[#allocation2 + $0xe0] sm:$0xff]
        %v413 = vld [vmem:[#allocation2 + $0xe8] sm:$0xff]
        %v414 = vld [vmem:[#allocation2 + $0xf0] sm:$0xff]
        %v415 = vld [vmem:[#allocation2 + $0xf8] sm:$0xff]
        %v416 = vld [vmem:[#allocation2 + $0x100] sm:$0xff]
        %v417 = vld [vmem:[#allocation2 + $0x108] sm:$0xff]
        %v418 = vld [vmem:[#allocation2 + $0x110] sm:$0xff]
        %v419 = vld [vmem:[#allocation2 + $0x118] sm:$0xff]
        %v420 = vld [vmem:[#allocation2 + $0x120] sm:$0xff]
        %v421 = vld [vmem:[#allocation2 + $0x128] sm:$0xff]
        %v422 = vld [vmem:[#allocation2 + $0x130] sm:$0xff]
        %v423 = vld [vmem:[#allocation2 + $0x138] sm:$0xff]
        %v425 = vsel %vm305, %v384, 0
        %v428 = vsel %vm305, %v385, 0
        %v431 = vsel %vm305, %v386, 0
        %v434 = vsel %vm305, %v387, 0
        %v437 = vsel %vm305, %v388, 0
        %v440 = vsel %vm305, %v389, 0
        %v443 = vsel %vm305, %v390, 0
        %v446 = vsel %vm305, %v391, 0
        %v449 = vsel %vm305, %v392, 0
        %v452 = vsel %vm305, %v393, 0
        %v455 = vsel %vm305, %v394, 0
        %v458 = vsel %vm305, %v395, 0
        %v461 = vsel %vm305, %v396, 0
        %v464 = vsel %vm305, %v397, 0
        %v467 = vsel %vm305, %v398, 0
        %v470 = vsel %vm305, %v399, 0
        %v473 = vsel %vm305, %v400, 0
        %v476 = vsel %vm305, %v401, 0
        %v479 = vsel %vm305, %v402, 0
        %v482 = vsel %vm305, %v403, 0
        %v485 = vsel %vm305, %v404, 0
        %v488 = vsel %vm305, %v405, 0
        %v491 = vsel %vm305, %v406, 0
        %v494 = vsel %vm305, %v407, 0
        %v497 = vsel %vm305, %v408, 0
        %v500 = vsel %vm305, %v409, 0
        %v503 = vsel %vm305, %v410, 0
        %v506 = vsel %vm305, %v411, 0
        %v509 = vsel %vm305, %v412, 0
        %v512 = vsel %vm305, %v413, 0
        %v515 = vsel %vm305, %v414, 0
        %v518 = vsel %vm305, %v415, 0
        %v521 = vsel %vm305, %v416, 0
        %v524 = vsel %vm305, %v417, 0
        %v527 = vsel %vm305, %v418, 0
        %v530 = vsel %vm305, %v419, 0
        %v533 = vsel %vm305, %v420, 0
        %v536 = vsel %vm305, %v421, 0
        %v539 = vsel %vm305, %v422, 0
        %v542 = vsel %vm305, %v423, 0
        %544 = vmatprep.subr.mxu0 0.0
        %545 = vmatpush1.msra.mxu0 %v374
        %546 = vmatprep.subr.mxu0 0.0
        %547 = vmatpush1.msra.mxu0 %v375
        %548 = vmatprep.subr.mxu0 0.0
        %549 = vmatpush1.msra.mxu0 0.0
        %550 = vmatprep.subr.mxu0 0.0
        %551 = vmatpush1.msra.mxu0 0.0
        %552 = vmatprep.subr.mxu0 0.0
        %553 = vmatpush1.msra.mxu0 0.0
        %554 = vmatprep.subr.mxu0 0.0
        %555 = vmatpush1.msra.mxu0 0.0
        %556 = vmatprep.subr.mxu0 0.0
        %557 = vmatpush1.msra.mxu0 0.0
        %558 = vmatprep.subr.mxu0 0.0
        %559 = vmatpush1.msra.mxu0 0.0
        %560 = vmatprep.subr.mxu0 0.0
        %561 = vmatpush1.msra.mxu0 0.0
        %562 = vmatprep.subr.mxu0 0.0
        %563 = vmatpush1.msra.mxu0 0.0
        %564 = vmatprep.subr.mxu0 0.0
        %565 = vmatpush1.msra.mxu0 0.0
        %566 = vmatprep.subr.mxu0 0.0
        %567 = vmatpush1.msra.mxu0 0.0
        %568 = vmatprep.subr.mxu0 0.0
        %569 = vmatpush1.msra.mxu0 0.0
        %570 = vmatprep.subr.mxu0 0.0
        %571 = vmatpush1.msra.mxu0 0.0
        %572 = vmatprep.subr.mxu0 0.0
        %573 = vmatpush1.msra.mxu0 0.0
        %574 = vmatprep.subr.mxu0 0.0
        %575 = vmatpush1.msra.mxu0 0.0
        %576 = vmatprep.subr.mxu0 0.0
        %577 = vmatpush1.msra.mxu0 0.0
        %578 = vmatprep.subr.mxu0 0.0
        %579 = vmatpush1.msra.mxu0 0.0
        %580 = vmatprep.subr.mxu0 0.0
        %581 = vmatpush1.msra.mxu0 0.0
        %582 = vmatprep.subr.mxu0 0.0
        %583 = vmatpush1.msra.mxu0 0.0
        %584 = vmatprep.subr.mxu0 0.0
        %585 = vmatpush1.msra.mxu0 0.0
        %586 = vmatprep.subr.mxu0 0.0
        %587 = vmatpush1.msra.mxu0 0.0
        %588 = vmatprep.subr.mxu0 0.0
        %589 = vmatpush1.msra.mxu0 0.0
        %590 = vmatprep.subr.mxu0 0.0
        %591 = vmatpush1.msra.mxu0 0.0
        %592 = vmatprep.subr.mxu0 0.0
        %593 = vmatpush1.msra.mxu0 0.0
        %594 = vmatprep.subr.mxu0 0.0
        %595 = vmatpush1.msra.mxu0 0.0
        %596 = vmatprep.subr.mxu0 0.0
        %597 = vmatpush1.msra.mxu0 0.0
        %598 = vmatprep.subr.mxu0 0.0
        %599 = vmatpush1.msra.mxu0 0.0
        %600 = vmatprep.subr.mxu0 0.0
        %601 = vmatpush1.msra.mxu0 0.0
        %602 = vmatprep.subr.mxu0 0.0
        %603 = vmatpush1.msra.mxu0 0.0
        %604 = vmatprep.subr.mxu0 0.0
        %605 = vmatpush1.msra.mxu0 0.0
        %606 = vmatprep.subr.mxu0 0.0
        %607 = vmatpush1.msra.mxu0 0.0
        %608 = vmatprep.mubr.f32.mxu0 0.0
        %609 = vmatmul.mubr.f32.gmra.mrb[0].mxu0 %v425
        %v610 = vpop.f32.mrb[0].mxu0
        %v611 = vadd.f32 0.0, %v610
        %v612 = vpop.f32.mrb[0].mxu0
        %613 = vmatprep.mubr.f32.mxu0 0.0
        %614 = vmatmul.mubr.f32.gmra.mrb[0].mxu0 %v428
        %v615 = vpop.f32.mrb[0].mxu0
        %v616 = vadd.f32 0.0, %v615
        %v617 = vpop.f32.mrb[0].mxu0
        %618 = vmatprep.mubr.f32.mxu0 0.0
        %619 = vmatmul.mubr.f32.gmra.mrb[0].mxu0 %v431
        %v620 = vpop.f32.mrb[0].mxu0
        %v621 = vadd.f32 0.0, %v620
        %v622 = vpop.f32.mrb[0].mxu0
        %623 = vmatprep.mubr.f32.mxu0 0.0
        %624 = vmatmul.mubr.f32.gmra.mrb[0].mxu0 %v434
        %v625 = vpop.f32.mrb[0].mxu0
        %v626 = vadd.f32 0.0, %v625
        %v627 = vpop.f32.mrb[0].mxu0
        %628 = vmatprep.mubr.f32.mxu0 0.0
        %629 = vmatmul.mubr.f32.gmra.mrb[0].mxu0 %v437
        %v630 = vpop.f32.mrb[0].mxu0
        %v631 = vadd.f32 0.0, %v630
        %v632 = vpop.f32.mrb[0].mxu0
        %633 = vmatprep.mubr.f32.mxu0 0.0
        %634 = vmatmul.mubr.f32.gmra.mrb[0].mxu0 %v440
        %v635 = vpop.f32.mrb[0].mxu0
        %v636 = vadd.f32 0.0, %v635
        %v637 = vpop.f32.mrb[0].mxu0
        %638 = vmatprep.mubr.f32.mxu0 0.0
        %639 = vmatmul.mubr.f32.gmra.mrb[0].mxu0 %v443
        %v640 = vpop.f32.mrb[0].mxu0
        %v641 = vadd.f32 0.0, %v640
        %v642 = vpop.f32.mrb[0].mxu0
        %643 = vmatprep.mubr.f32.mxu0 0.0
        %644 = vmatmul.mubr.f32.gmra.mrb[0].mxu0 %v446
        %v645 = vpop.f32.mrb[0].mxu0
        %v646 = vadd.f32 0.0, %v645
        %v647 = vpop.f32.mrb[0].mxu0
        %648 = vmatprep.mubr.f32.mxu0 0.0
        %649 = vmatmul.mubr.f32.gmra.mrb[0].mxu0 %v449
        %v650 = vpop.f32.mrb[0].mxu0
        %v651 = vadd.f32 0.0, %v650
        %v652 = vpop.f32.mrb[0].mxu0
        %653 = vmatprep.mubr.f32.mxu0 0.0
        %654 = vmatmul.mubr.f32.gmra.mrb[0].mxu0 %v452
        %v655 = vpop.f32.mrb[0].mxu0
        %v656 = vadd.f32 0.0, %v655
        %v657 = vpop.f32.mrb[0].mxu0
        %658 = vmatprep.mubr.f32.mxu0 0.0
        %659 = vmatmul.mubr.f32.gmra.mrb[0].mxu0 %v455
        %v660 = vpop.f32.mrb[0].mxu0
        %v661 = vadd.f32 0.0, %v660
        %v662 = vpop.f32.mrb[0].mxu0
        %663 = vmatprep.mubr.f32.mxu0 0.0
        %664 = vmatmul.mubr.f32.gmra.mrb[0].mxu0 %v458
        %v665 = vpop.f32.mrb[0].mxu0
        %v666 = vadd.f32 0.0, %v665
        %v667 = vpop.f32.mrb[0].mxu0
        %668 = vmatprep.mubr.f32.mxu0 0.0
        %669 = vmatmul.mubr.f32.gmra.mrb[0].mxu0 %v461
        %v670 = vpop.f32.mrb[0].mxu0
        %v671 = vadd.f32 0.0, %v670
        %v672 = vpop.f32.mrb[0].mxu0
        %673 = vmatprep.mubr.f32.mxu0 0.0
        %674 = vmatmul.mubr.f32.gmra.mrb[0].mxu0 %v464
        %v675 = vpop.f32.mrb[0].mxu0
        %v676 = vadd.f32 0.0, %v675
        %v677 = vpop.f32.mrb[0].mxu0
        %678 = vmatprep.mubr.f32.mxu0 0.0
        %679 = vmatmul.mubr.f32.gmra.mrb[0].mxu0 %v467
        %v680 = vpop.f32.mrb[0].mxu0
        %v681 = vadd.f32 0.0, %v680
        %v682 = vpop.f32.mrb[0].mxu0
        %683 = vmatprep.mubr.f32.mxu0 0.0
        %684 = vmatmul.mubr.f32.gmra.mrb[0].mxu0 %v470
        %v685 = vpop.f32.mrb[0].mxu0
        %v686 = vadd.f32 0.0, %v685
        %v687 = vpop.f32.mrb[0].mxu0
        %688 = vmatprep.mubr.f32.mxu0 0.0
        %689 = vmatmul.mubr.f32.gmra.mrb[0].mxu0 %v473
        %v690 = vpop.f32.mrb[0].mxu0
        %v691 = vadd.f32 0.0, %v690
        %v692 = vpop.f32.mrb[0].mxu0
        %693 = vmatprep.mubr.f32.mxu0 0.0
        %694 = vmatmul.mubr.f32.gmra.mrb[0].mxu0 %v476
        %v695 = vpop.f32.mrb[0].mxu0
        %v696 = vadd.f32 0.0, %v695
        %v697 = vpop.f32.mrb[0].mxu0
        %698 = vmatprep.mubr.f32.mxu0 0.0
        %699 = vmatmul.mubr.f32.gmra.mrb[0].mxu0 %v479
        %v700 = vpop.f32.mrb[0].mxu0
        %v701 = vadd.f32 0.0, %v700
        %v702 = vpop.f32.mrb[0].mxu0
        %703 = vmatprep.mubr.f32.mxu0 0.0
        %704 = vmatmul.mubr.f32.gmra.mrb[0].mxu0 %v482
        %v705 = vpop.f32.mrb[0].mxu0
        %v706 = vadd.f32 0.0, %v705
        %v707 = vpop.f32.mrb[0].mxu0
        %708 = vmatprep.mubr.f32.mxu0 0.0
        %709 = vmatmul.mubr.f32.gmra.mrb[0].mxu0 %v485
        %v710 = vpop.f32.mrb[0].mxu0
        %v711 = vadd.f32 0.0, %v710
        %v712 = vpop.f32.mrb[0].mxu0
        %713 = vmatprep.mubr.f32.mxu0 0.0
        %714 = vmatmul.mubr.f32.gmra.mrb[0].mxu0 %v488
        %v715 = vpop.f32.mrb[0].mxu0
        %v716 = vadd.f32 0.0, %v715
        %v717 = vpop.f32.mrb[0].mxu0
        %718 = vmatprep.mubr.f32.mxu0 0.0
        %719 = vmatmul.mubr.f32.gmra.mrb[0].mxu0 %v491
        %v720 = vpop.f32.mrb[0].mxu0
        %v721 = vadd.f32 0.0, %v720
        %v722 = vpop.f32.mrb[0].mxu0
        %723 = vmatprep.mubr.f32.mxu0 0.0
        %724 = vmatmul.mubr.f32.gmra.mrb[0].mxu0 %v494
        %v725 = vpop.f32.mrb[0].mxu0
        %v726 = vadd.f32 0.0, %v725
        %v727 = vpop.f32.mrb[0].mxu0
        %728 = vmatprep.mubr.f32.mxu0 0.0
        %729 = vmatmul.mubr.f32.gmra.mrb[0].mxu0 %v497
        %v730 = vpop.f32.mrb[0].mxu0
        %v731 = vadd.f32 0.0, %v730
        %v732 = vpop.f32.mrb[0].mxu0
        %733 = vmatprep.mubr.f32.mxu0 0.0
        %734 = vmatmul.mubr.f32.gmra.mrb[0].mxu0 %v500
        %v735 = vpop.f32.mrb[0].mxu0
        %v736 = vadd.f32 0.0, %v735
        %v737 = vpop.f32.mrb[0].mxu0
        %738 = vmatprep.mubr.f32.mxu0 0.0
        %739 = vmatmul.mubr.f32.gmra.mrb[0].mxu0 %v503
        %v740 = vpop.f32.mrb[0].mxu0
        %v741 = vadd.f32 0.0, %v740
        %v742 = vpop.f32.mrb[0].mxu0
        %743 = vmatprep.mubr.f32.mxu0 0.0
        %744 = vmatmul.mubr.f32.gmra.mrb[0].mxu0 %v506
        %v745 = vpop.f32.mrb[0].mxu0
        %v746 = vadd.f32 0.0, %v745
        %v747 = vpop.f32.mrb[0].mxu0
        %748 = vmatprep.mubr.f32.mxu0 0.0
        %749 = vmatmul.mubr.f32.gmra.mrb[0].mxu0 %v509
        %v750 = vpop.f32.mrb[0].mxu0
        %v751 = vadd.f32 0.0, %v750
        %v752 = vpop.f32.mrb[0].mxu0
        %753 = vmatprep.mubr.f32.mxu0 0.0
        %754 = vmatmul.mubr.f32.gmra.mrb[0].mxu0 %v512
        %v755 = vpop.f32.mrb[0].mxu0
        %v756 = vadd.f32 0.0, %v755
        %v757 = vpop.f32.mrb[0].mxu0
        %758 = vmatprep.mubr.f32.mxu0 0.0
        %759 = vmatmul.mubr.f32.gmra.mrb[0].mxu0 %v515
        %v760 = vpop.f32.mrb[0].mxu0
        %v761 = vadd.f32 0.0, %v760
        %v762 = vpop.f32.mrb[0].mxu0
        %763 = vmatprep.mubr.f32.mxu0 0.0
        %764 = vmatmul.mubr.f32.gmra.mrb[0].mxu0 %v518
        %v765 = vpop.f32.mrb[0].mxu0
        %v766 = vadd.f32 0.0, %v765
        %v767 = vpop.f32.mrb[0].mxu0
        %768 = vmatprep.mubr.f32.mxu0 0.0
        %769 = vmatmul.mubr.f32.gmra.mrb[0].mxu0 %v521
        %v770 = vpop.f32.mrb[0].mxu0
        %v771 = vadd.f32 0.0, %v770
        %v772 = vpop.f32.mrb[0].mxu0
        %773 = vmatprep.mubr.f32.mxu0 0.0
        %774 = vmatmul.mubr.f32.gmra.mrb[0].mxu0 %v524
        %v775 = vpop.f32.mrb[0].mxu0
        %v776 = vadd.f32 0.0, %v775
        %v777 = vpop.f32.mrb[0].mxu0
        %778 = vmatprep.mubr.f32.mxu0 0.0
        %779 = vmatmul.mubr.f32.gmra.mrb[0].mxu0 %v527
        %v780 = vpop.f32.mrb[0].mxu0
        %v781 = vadd.f32 0.0, %v780
        %v782 = vpop.f32.mrb[0].mxu0
        %783 = vmatprep.mubr.f32.mxu0 0.0
        %784 = vmatmul.mubr.f32.gmra.mrb[0].mxu0 %v530
        %v785 = vpop.f32.mrb[0].mxu0
        %v786 = vadd.f32 0.0, %v785
        %v787 = vpop.f32.mrb[0].mxu0
        %788 = vmatprep.mubr.f32.mxu0 0.0
        %789 = vmatmul.mubr.f32.gmra.mrb[0].mxu0 %v533
        %v790 = vpop.f32.mrb[0].mxu0
        %v791 = vadd.f32 0.0, %v790
        %v792 = vpop.f32.mrb[0].mxu0
        %793 = vmatprep.mubr.f32.mxu0 0.0
        %794 = vmatmul.mubr.f32.gmra.mrb[0].mxu0 %v536
        %v795 = vpop.f32.mrb[0].mxu0
        %v796 = vadd.f32 0.0, %v795
        %v797 = vpop.f32.mrb[0].mxu0
        %798 = vmatprep.mubr.f32.mxu0 0.0
        %799 = vmatmul.mubr.f32.gmra.mrb[0].mxu0 %v539
        %v800 = vpop.f32.mrb[0].mxu0
        %v801 = vadd.f32 0.0, %v800
        %v802 = vpop.f32.mrb[0].mxu0
        %803 = vmatprep.mubr.f32.mxu0 0.0
        %804 = vmatmul.mubr.f32.gmra.mrb[0].mxu0 %v542
        %v805 = vpop.f32.mrb[0].mxu0
        %v806 = vadd.f32 0.0, %v805
        %v807 = vpop.f32.mrb[0].mxu0
        %808 = vdwg.mxu0
        %vm809 = vcmask 523264
        %v811 = vsel %vm809, %v376, 0
        %v814 = vsel %vm809, %v377, 0
        %v817 = vsel %vm809, %v378, 0
        %v820 = vsel %vm809, %v379, 0
        %v823 = vsel %vm809, %v380, 0
        %v826 = vsel %vm809, %v381, 0
        %v829 = vsel %vm809, %v382, 0
        %v832 = vsel %vm809, %v383, 0
        %834 = vmatprep.subr.mxu0 0.0
        %835 = vmatpush1.msra.mxu0 %v611
        %836 = vmatprep.subr.mxu0 0.0
        %837 = vmatpush1.msra.mxu0 %v616
        %838 = vmatprep.subr.mxu0 0.0
        %839 = vmatpush1.msra.mxu0 %v621
        %840 = vmatprep.subr.mxu0 0.0
        %841 = vmatpush1.msra.mxu0 %v626
        %842 = vmatprep.subr.mxu0 0.0
        %843 = vmatpush1.msra.mxu0 %v631
        %844 = vmatprep.subr.mxu0 0.0
        %845 = vmatpush1.msra.mxu0 %v636
        %846 = vmatprep.subr.mxu0 0.0
        %847 = vmatpush1.msra.mxu0 %v641
        %848 = vmatprep.subr.mxu0 0.0
        %849 = vmatpush1.msra.mxu0 %v646
        %850 = vmatprep.subr.mxu0 0.0
        %851 = vmatpush1.msra.mxu0 0.0
        %852 = vmatprep.subr.mxu0 0.0
        %853 = vmatpush1.msra.mxu0 0.0
        %854 = vmatprep.subr.mxu0 0.0
        %855 = vmatpush1.msra.mxu0 0.0
        %856 = vmatprep.subr.mxu0 0.0
        %857 = vmatpush1.msra.mxu0 0.0
        %858 = vmatprep.subr.mxu0 0.0
        %859 = vmatpush1.msra.mxu0 0.0
        %860 = vmatprep.subr.mxu0 0.0
        %861 = vmatpush1.msra.mxu0 0.0
        %862 = vmatprep.subr.mxu0 0.0
        %863 = vmatpush1.msra.mxu0 0.0
        %864 = vmatprep.subr.mxu0 0.0
        %865 = vmatpush1.msra.mxu0 0.0
        %866 = vmatprep.subr.mxu0 0.0
        %867 = vmatpush1.msra.mxu0 0.0
        %868 = vmatprep.subr.mxu0 0.0
        %869 = vmatpush1.msra.mxu0 0.0
        %870 = vmatprep.subr.mxu0 0.0
        %871 = vmatpush1.msra.mxu0 0.0
        %872 = vmatprep.subr.mxu0 0.0
        %873 = vmatpush1.msra.mxu0 0.0
        %874 = vmatprep.subr.mxu0 0.0
        %875 = vmatpush1.msra.mxu0 0.0
        %876 = vmatprep.subr.mxu0 0.0
        %877 = vmatpush1.msra.mxu0 0.0
        %878 = vmatprep.subr.mxu0 0.0
        %879 = vmatpush1.msra.mxu0 0.0
        %880 = vmatprep.subr.mxu0 0.0
        %881 = vmatpush1.msra.mxu0 0.0
        %882 = vmatprep.subr.mxu0 0.0
        %883 = vmatpush1.msra.mxu0 0.0
        %884 = vmatprep.subr.mxu0 0.0
        %885 = vmatpush1.msra.mxu0 0.0
        %886 = vmatprep.subr.mxu0 0.0
        %887 = vmatpush1.msra.mxu0 0.0
        %888 = vmatprep.subr.mxu0 0.0
        %889 = vmatpush1.msra.mxu0 0.0
        %890 = vmatprep.subr.mxu0 0.0
        %891 = vmatpush1.msra.mxu0 0.0
        %892 = vmatprep.subr.mxu0 0.0
        %893 = vmatpush1.msra.mxu0 0.0
        %894 = vmatprep.subr.mxu0 0.0
        %895 = vmatpush1.msra.mxu0 0.0
        %896 = vmatprep.subr.mxu0 0.0
        %897 = vmatpush1.msra.mxu0 0.0
        %898 = vmatprep.mubr.f32.mxu0 0.0
        %899 = vmatmul.mubr.f32.gmra.mrb[0].mxu0 %v811
        %v900 = vpop.f32.mrb[0].mxu0
        %v901 = vadd.f32 0.0, %v900
        %v902 = vpop.f32.mrb[0].mxu0
        %903 = vmatprep.mubr.f32.mxu0 0.0
        %904 = vmatmul.mubr.f32.gmra.mrb[0].mxu0 %v814
        %v905 = vpop.f32.mrb[0].mxu0
        %v906 = vadd.f32 0.0, %v905
        %v907 = vpop.f32.mrb[0].mxu0
        %908 = vmatprep.mubr.f32.mxu0 0.0
        %909 = vmatmul.mubr.f32.gmra.mrb[0].mxu0 %v817
        %v910 = vpop.f32.mrb[0].mxu0
        %v911 = vadd.f32 0.0, %v910
        %v912 = vpop.f32.mrb[0].mxu0
        %913 = vmatprep.mubr.f32.mxu0 0.0
        %914 = vmatmul.mubr.f32.gmra.mrb[0].mxu0 %v820
        %v915 = vpop.f32.mrb[0].mxu0
        %v916 = vadd.f32 0.0, %v915
        %v917 = vpop.f32.mrb[0].mxu0
        %918 = vmatprep.mubr.f32.mxu0 0.0
        %919 = vmatmul.mubr.f32.gmra.mrb[0].mxu0 %v823
        %v920 = vpop.f32.mrb[0].mxu0
        %v921 = vadd.f32 0.0, %v920
        %v922 = vpop.f32.mrb[0].mxu0
        %923 = vmatprep.mubr.f32.mxu0 0.0
        %924 = vmatmul.mubr.f32.gmra.mrb[0].mxu0 %v826
        %v925 = vpop.f32.mrb[0].mxu0
        %v926 = vadd.f32 0.0, %v925
        %v927 = vpop.f32.mrb[0].mxu0
        %928 = vmatprep.mubr.f32.mxu0 0.0
        %929 = vmatmul.mubr.f32.gmra.mrb[0].mxu0 %v829
        %v930 = vpop.f32.mrb[0].mxu0
        %v931 = vadd.f32 0.0, %v930
        %v932 = vpop.f32.mrb[0].mxu0
        %933 = vmatprep.mubr.f32.mxu0 0.0
        %934 = vmatmul.mubr.f32.gmra.mrb[0].mxu0 %v832
        %v935 = vpop.f32.mrb[0].mxu0
        %v936 = vadd.f32 0.0, %v935
        %v937 = vpop.f32.mrb[0].mxu0
        %938 = vdwg.mxu0
        %939 = vmatprep.subr.mxu0 0.0
        %940 = vmatpush1.msra.mxu0 %v651
        %941 = vmatprep.subr.mxu0 0.0
        %942 = vmatpush1.msra.mxu0 %v656
        %943 = vmatprep.subr.mxu0 0.0
        %944 = vmatpush1.msra.mxu0 %v661
        %945 = vmatprep.subr.mxu0 0.0
        %946 = vmatpush1.msra.mxu0 %v666
        %947 = vmatprep.subr.mxu0 0.0
        %948 = vmatpush1.msra.mxu0 %v671
        %949 = vmatprep.subr.mxu0 0.0
        %950 = vmatpush1.msra.mxu0 %v676
        %951 = vmatprep.subr.mxu0 0.0
        %952 = vmatpush1.msra.mxu0 %v681
        %953 = vmatprep.subr.mxu0 0.0
        %954 = vmatpush1.msra.mxu0 %v686
        %955 = vmatprep.subr.mxu0 0.0
        %956 = vmatpush1.msra.mxu0 0.0
        %957 = vmatprep.subr.mxu0 0.0
        %958 = vmatpush1.msra.mxu0 0.0
        %959 = vmatprep.subr.mxu0 0.0
        %960 = vmatpush1.msra.mxu0 0.0
        %961 = vmatprep.subr.mxu0 0.0
        %962 = vmatpush1.msra.mxu0 0.0
        %963 = vmatprep.subr.mxu0 0.0
        %964 = vmatpush1.msra.mxu0 0.0
        %965 = vmatprep.subr.mxu0 0.0
        %966 = vmatpush1.msra.mxu0 0.0
        %967 = vmatprep.subr.mxu0 0.0
        %968 = vmatpush1.msra.mxu0 0.0
        %969 = vmatprep.subr.mxu0 0.0
        %970 = vmatpush1.msra.mxu0 0.0
        %971 = vmatprep.subr.mxu0 0.0
        %972 = vmatpush1.msra.mxu0 0.0
        %973 = vmatprep.subr.mxu0 0.0
        %974 = vmatpush1.msra.mxu0 0.0
        %975 = vmatprep.subr.mxu0 0.0
        %976 = vmatpush1.msra.mxu0 0.0
        %977 = vmatprep.subr.mxu0 0.0
        %978 = vmatpush1.msra.mxu0 0.0
        %979 = vmatprep.subr.mxu0 0.0
        %980 = vmatpush1.msra.mxu0 0.0
        %981 = vmatprep.subr.mxu0 0.0
        %982 = vmatpush1.msra.mxu0 0.0
        %983 = vmatprep.subr.mxu0 0.0
        %984 = vmatpush1.msra.mxu0 0.0
        %985 = vmatprep.subr.mxu0 0.0
        %986 = vmatpush1.msra.mxu0 0.0
        %987 = vmatprep.subr.mxu0 0.0
        %988 = vmatpush1.msra.mxu0 0.0
        %989 = vmatprep.subr.mxu0 0.0
        %990 = vmatpush1.msra.mxu0 0.0
        %991 = vmatprep.subr.mxu0 0.0
        %992 = vmatpush1.msra.mxu0 0.0
        %993 = vmatprep.subr.mxu0 0.0
        %994 = vmatpush1.msra.mxu0 0.0
        %995 = vmatprep.subr.mxu0 0.0
        %996 = vmatpush1.msra.mxu0 0.0
        %997 = vmatprep.subr.mxu0 0.0
        %998 = vmatpush1.msra.mxu0 0.0
        %999 = vmatprep.subr.mxu0 0.0
        %1000 = vmatpush1.msra.mxu0 0.0
        %1001 = vmatprep.subr.mxu0 0.0
        %1002 = vmatpush1.msra.mxu0 0.0
        %1003 = vmatprep.mubr.f32.mxu0 0.0
        %1004 = vmatmul.mubr.f32.gmra.mrb[0].mxu0 %v811
        %v1005 = vpop.f32.mrb[0].mxu0
        %v1006 = vadd.f32 0.0, %v1005
        %v1007 = vpop.f32.mrb[0].mxu0
        %1008 = vmatprep.mubr.f32.mxu0 0.0
        %1009 = vmatmul.mubr.f32.gmra.mrb[0].mxu0 %v814
        %v1010 = vpop.f32.mrb[0].mxu0
        %v1011 = vadd.f32 0.0, %v1010
        %v1012 = vpop.f32.mrb[0].mxu0
        %1013 = vmatprep.mubr.f32.mxu0 0.0
        %1014 = vmatmul.mubr.f32.gmra.mrb[0].mxu0 %v817
        %v1015 = vpop.f32.mrb[0].mxu0
        %v1016 = vadd.f32 0.0, %v1015
        %v1017 = vpop.f32.mrb[0].mxu0
        %1018 = vmatprep.mubr.f32.mxu0 0.0
        %1019 = vmatmul.mubr.f32.gmra.mrb[0].mxu0 %v820
        %v1020 = vpop.f32.mrb[0].mxu0
        %v1021 = vadd.f32 0.0, %v1020
        %v1022 = vpop.f32.mrb[0].mxu0
        %1023 = vmatprep.mubr.f32.mxu0 0.0
        %1024 = vmatmul.mubr.f32.gmra.mrb[0].mxu0 %v823
        %v1025 = vpop.f32.mrb[0].mxu0
        %v1026 = vadd.f32 0.0, %v1025
        %v1027 = vpop.f32.mrb[0].mxu0
        %1028 = vmatprep.mubr.f32.mxu0 0.0
        %1029 = vmatmul.mubr.f32.gmra.mrb[0].mxu0 %v826
        %v1030 = vpop.f32.mrb[0].mxu0
        %v1031 = vadd.f32 0.0, %v1030
        %v1032 = vpop.f32.mrb[0].mxu0
        %1033 = vmatprep.mubr.f32.mxu0 0.0
        %1034 = vmatmul.mubr.f32.gmra.mrb[0].mxu0 %v829
        %v1035 = vpop.f32.mrb[0].mxu0
        %v1036 = vadd.f32 0.0, %v1035
        %v1037 = vpop.f32.mrb[0].mxu0
        %1038 = vmatprep.mubr.f32.mxu0 0.0
        %1039 = vmatmul.mubr.f32.gmra.mrb[0].mxu0 %v832
        %v1040 = vpop.f32.mrb[0].mxu0
        %v1041 = vadd.f32 0.0, %v1040
        %v1042 = vpop.f32.mrb[0].mxu0
        %1043 = vdwg.mxu0
        %1044 = vmatprep.subr.mxu0 0.0
        %1045 = vmatpush1.msra.mxu0 %v691
        %1046 = vmatprep.subr.mxu0 0.0
        %1047 = vmatpush1.msra.mxu0 %v696
        %1048 = vmatprep.subr.mxu0 0.0
        %1049 = vmatpush1.msra.mxu0 %v701
        %1050 = vmatprep.subr.mxu0 0.0
        %1051 = vmatpush1.msra.mxu0 %v706
        %1052 = vmatprep.subr.mxu0 0.0
        %1053 = vmatpush1.msra.mxu0 %v711
        %1054 = vmatprep.subr.mxu0 0.0
        %1055 = vmatpush1.msra.mxu0 %v716
        %1056 = vmatprep.subr.mxu0 0.0
        %1057 = vmatpush1.msra.mxu0 %v721
        %1058 = vmatprep.subr.mxu0 0.0
        %1059 = vmatpush1.msra.mxu0 %v726
        %1060 = vmatprep.subr.mxu0 0.0
        %1061 = vmatpush1.msra.mxu0 0.0
        %1062 = vmatprep.subr.mxu0 0.0
        %1063 = vmatpush1.msra.mxu0 0.0
        %1064 = vmatprep.subr.mxu0 0.0
        %1065 = vmatpush1.msra.mxu0 0.0
        %1066 = vmatprep.subr.mxu0 0.0
        %1067 = vmatpush1.msra.mxu0 0.0
        %1068 = vmatprep.subr.mxu0 0.0
        %1069 = vmatpush1.msra.mxu0 0.0
        %1070 = vmatprep.subr.mxu0 0.0
        %1071 = vmatpush1.msra.mxu0 0.0
        %1072 = vmatprep.subr.mxu0 0.0
        %1073 = vmatpush1.msra.mxu0 0.0
        %1074 = vmatprep.subr.mxu0 0.0
        %1075 = vmatpush1.msra.mxu0 0.0
        %1076 = vmatprep.subr.mxu0 0.0
        %1077 = vmatpush1.msra.mxu0 0.0
        %1078 = vmatprep.subr.mxu0 0.0
        %1079 = vmatpush1.msra.mxu0 0.0
        %1080 = vmatprep.subr.mxu0 0.0
        %1081 = vmatpush1.msra.mxu0 0.0
        %1082 = vmatprep.subr.mxu0 0.0
        %1083 = vmatpush1.msra.mxu0 0.0
        %1084 = vmatprep.subr.mxu0 0.0
        %1085 = vmatpush1.msra.mxu0 0.0
        %1086 = vmatprep.subr.mxu0 0.0
        %1087 = vmatpush1.msra.mxu0 0.0
        %1088 = vmatprep.subr.mxu0 0.0
        %1089 = vmatpush1.msra.mxu0 0.0
        %1090 = vmatprep.subr.mxu0 0.0
        %1091 = vmatpush1.msra.mxu0 0.0
        %1092 = vmatprep.subr.mxu0 0.0
        %1093 = vmatpush1.msra.mxu0 0.0
        %1094 = vmatprep.subr.mxu0 0.0
        %1095 = vmatpush1.msra.mxu0 0.0
        %1096 = vmatprep.subr.mxu0 0.0
        %1097 = vmatpush1.msra.mxu0 0.0
        %1098 = vmatprep.subr.mxu0 0.0
        %1099 = vmatpush1.msra.mxu0 0.0
        %1100 = vmatprep.subr.mxu0 0.0
        %1101 = vmatpush1.msra.mxu0 0.0
        %1102 = vmatprep.subr.mxu0 0.0
        %1103 = vmatpush1.msra.mxu0 0.0
        %1104 = vmatprep.subr.mxu0 0.0
        %1105 = vmatpush1.msra.mxu0 0.0
        %1106 = vmatprep.subr.mxu0 0.0
        %1107 = vmatpush1.msra.mxu0 0.0
        %1108 = vmatprep.mubr.f32.mxu0 0.0
        %1109 = vmatmul.mubr.f32.gmra.mrb[0].mxu0 %v811
        %v1110 = vpop.f32.mrb[0].mxu0
        %v1111 = vadd.f32 0.0, %v1110
        %v1112 = vpop.f32.mrb[0].mxu0
        %1113 = vmatprep.mubr.f32.mxu0 0.0
        %1114 = vmatmul.mubr.f32.gmra.mrb[0].mxu0 %v814
        %v1115 = vpop.f32.mrb[0].mxu0
        %v1116 = vadd.f32 0.0, %v1115
        %v1117 = vpop.f32.mrb[0].mxu0
        %1118 = vmatprep.mubr.f32.mxu0 0.0
        %1119 = vmatmul.mubr.f32.gmra.mrb[0].mxu0 %v817
        %v1120 = vpop.f32.mrb[0].mxu0
        %v1121 = vadd.f32 0.0, %v1120
        %v1122 = vpop.f32.mrb[0].mxu0
        %1123 = vmatprep.mubr.f32.mxu0 0.0
        %1124 = vmatmul.mubr.f32.gmra.mrb[0].mxu0 %v820
        %v1125 = vpop.f32.mrb[0].mxu0
        %v1126 = vadd.f32 0.0, %v1125
        %v1127 = vpop.f32.mrb[0].mxu0
        %1128 = vmatprep.mubr.f32.mxu0 0.0
        %1129 = vmatmul.mubr.f32.gmra.mrb[0].mxu0 %v823
        %v1130 = vpop.f32.mrb[0].mxu0
        %v1131 = vadd.f32 0.0, %v1130
        %v1132 = vpop.f32.mrb[0].mxu0
        %1133 = vmatprep.mubr.f32.mxu0 0.0
        %1134 = vmatmul.mubr.f32.gmra.mrb[0].mxu0 %v826
        %v1135 = vpop.f32.mrb[0].mxu0
        %v1136 = vadd.f32 0.0, %v1135
        %v1137 = vpop.f32.mrb[0].mxu0
        %1138 = vmatprep.mubr.f32.mxu0 0.0
        %1139 = vmatmul.mubr.f32.gmra.mrb[0].mxu0 %v829
        %v1140 = vpop.f32.mrb[0].mxu0
        %v1141 = vadd.f32 0.0, %v1140
        %v1142 = vpop.f32.mrb[0].mxu0
        %1143 = vmatprep.mubr.f32.mxu0 0.0
        %1144 = vmatmul.mubr.f32.gmra.mrb[0].mxu0 %v832
        %v1145 = vpop.f32.mrb[0].mxu0
        %v1146 = vadd.f32 0.0, %v1145
        %v1147 = vpop.f32.mrb[0].mxu0
        %1148 = vdwg.mxu0
        %1149 = vmatprep.subr.mxu0 0.0
        %1150 = vmatpush1.msra.mxu0 %v731
        %1151 = vmatprep.subr.mxu0 0.0
        %1152 = vmatpush1.msra.mxu0 %v736
        %1153 = vmatprep.subr.mxu0 0.0
        %1154 = vmatpush1.msra.mxu0 %v741
        %1155 = vmatprep.subr.mxu0 0.0
        %1156 = vmatpush1.msra.mxu0 %v746
        %1157 = vmatprep.subr.mxu0 0.0
        %1158 = vmatpush1.msra.mxu0 %v751
        %1159 = vmatprep.subr.mxu0 0.0
        %1160 = vmatpush1.msra.mxu0 %v756
        %1161 = vmatprep.subr.mxu0 0.0
        %1162 = vmatpush1.msra.mxu0 %v761
        %1163 = vmatprep.subr.mxu0 0.0
        %1164 = vmatpush1.msra.mxu0 %v766
        %1165 = vmatprep.subr.mxu0 0.0
        %1166 = vmatpush1.msra.mxu0 0.0
        %1167 = vmatprep.subr.mxu0 0.0
        %1168 = vmatpush1.msra.mxu0 0.0
        %1169 = vmatprep.subr.mxu0 0.0
        %1170 = vmatpush1.msra.mxu0 0.0
        %1171 = vmatprep.subr.mxu0 0.0
        %1172 = vmatpush1.msra.mxu0 0.0
        %1173 = vmatprep.subr.mxu0 0.0
        %1174 = vmatpush1.msra.mxu0 0.0
        %1175 = vmatprep.subr.mxu0 0.0
        %1176 = vmatpush1.msra.mxu0 0.0
        %1177 = vmatprep.subr.mxu0 0.0
        %1178 = vmatpush1.msra.mxu0 0.0
        %1179 = vmatprep.subr.mxu0 0.0
        %1180 = vmatpush1.msra.mxu0 0.0
        %1181 = vmatprep.subr.mxu0 0.0
        %1182 = vmatpush1.msra.mxu0 0.0
        %1183 = vmatprep.subr.mxu0 0.0
        %1184 = vmatpush1.msra.mxu0 0.0
        %1185 = vmatprep.subr.mxu0 0.0
        %1186 = vmatpush1.msra.mxu0 0.0
        %1187 = vmatprep.subr.mxu0 0.0
        %1188 = vmatpush1.msra.mxu0 0.0
        %1189 = vmatprep.subr.mxu0 0.0
        %1190 = vmatpush1.msra.mxu0 0.0
        %1191 = vmatprep.subr.mxu0 0.0
        %1192 = vmatpush1.msra.mxu0 0.0
        %1193 = vmatprep.subr.mxu0 0.0
        %1194 = vmatpush1.msra.mxu0 0.0
        %1195 = vmatprep.subr.mxu0 0.0
        %1196 = vmatpush1.msra.mxu0 0.0
        %1197 = vmatprep.subr.mxu0 0.0
        %1198 = vmatpush1.msra.mxu0 0.0
        %1199 = vmatprep.subr.mxu0 0.0
        %1200 = vmatpush1.msra.mxu0 0.0
        %1201 = vmatprep.subr.mxu0 0.0
        %1202 = vmatpush1.msra.mxu0 0.0
        %1203 = vmatprep.subr.mxu0 0.0
        %1204 = vmatpush1.msra.mxu0 0.0
        %1205 = vmatprep.subr.mxu0 0.0
        %1206 = vmatpush1.msra.mxu0 0.0
        %1207 = vmatprep.subr.mxu0 0.0
        %1208 = vmatpush1.msra.mxu0 0.0
        %1209 = vmatprep.subr.mxu0 0.0
        %1210 = vmatpush1.msra.mxu0 0.0
        %1211 = vmatprep.subr.mxu0 0.0
        %1212 = vmatpush1.msra.mxu0 0.0
        %1213 = vmatprep.mubr.f32.mxu0 0.0
        %1214 = vmatmul.mubr.f32.gmra.mrb[0].mxu0 %v811
        %v1215 = vpop.f32.mrb[0].mxu0
        %v1216 = vadd.f32 0.0, %v1215
        %v1217 = vpop.f32.mrb[0].mxu0
        %1218 = vmatprep.mubr.f32.mxu0 0.0
        %1219 = vmatmul.mubr.f32.gmra.mrb[0].mxu0 %v814
        %v1220 = vpop.f32.mrb[0].mxu0
        %v1221 = vadd.f32 0.0, %v1220
        %v1222 = vpop.f32.mrb[0].mxu0
        %1223 = vmatprep.mubr.f32.mxu0 0.0
        %1224 = vmatmul.mubr.f32.gmra.mrb[0].mxu0 %v817
        %v1225 = vpop.f32.mrb[0].mxu0
        %v1226 = vadd.f32 0.0, %v1225
        %v1227 = vpop.f32.mrb[0].mxu0
        %1228 = vmatprep.mubr.f32.mxu0 0.0
        %1229 = vmatmul.mubr.f32.gmra.mrb[0].mxu0 %v820
        %v1230 = vpop.f32.mrb[0].mxu0
        %v1231 = vadd.f32 0.0, %v1230
        %v1232 = vpop.f32.mrb[0].mxu0
        %1233 = vmatprep.mubr.f32.mxu0 0.0
        %1234 = vmatmul.mubr.f32.gmra.mrb[0].mxu0 %v823
        %v1235 = vpop.f32.mrb[0].mxu0
        %v1236 = vadd.f32 0.0, %v1235
        %v1237 = vpop.f32.mrb[0].mxu0
        %1238 = vmatprep.mubr.f32.mxu0 0.0
        %1239 = vmatmul.mubr.f32.gmra.mrb[0].mxu0 %v826
        %v1240 = vpop.f32.mrb[0].mxu0
        %v1241 = vadd.f32 0.0, %v1240
        %v1242 = vpop.f32.mrb[0].mxu0
        %1243 = vmatprep.mubr.f32.mxu0 0.0
        %1244 = vmatmul.mubr.f32.gmra.mrb[0].mxu0 %v829
        %v1245 = vpop.f32.mrb[0].mxu0
        %v1246 = vadd.f32 0.0, %v1245
        %v1247 = vpop.f32.mrb[0].mxu0
        %1248 = vmatprep.mubr.f32.mxu0 0.0
        %1249 = vmatmul.mubr.f32.gmra.mrb[0].mxu0 %v832
        %v1250 = vpop.f32.mrb[0].mxu0
        %v1251 = vadd.f32 0.0, %v1250
        %v1252 = vpop.f32.mrb[0].mxu0
        %1253 = vdwg.mxu0
        %1254 = vmatprep.subr.mxu0 0.0
        %1255 = vmatpush1.msra.mxu0 %v771
        %1256 = vmatprep.subr.mxu0 0.0
        %1257 = vmatpush1.msra.mxu0 %v776
        %1258 = vmatprep.subr.mxu0 0.0
        %1259 = vmatpush1.msra.mxu0 %v781
        %1260 = vmatprep.subr.mxu0 0.0
        %1261 = vmatpush1.msra.mxu0 %v786
        %1262 = vmatprep.subr.mxu0 0.0
        %1263 = vmatpush1.msra.mxu0 %v791
        %1264 = vmatprep.subr.mxu0 0.0
        %1265 = vmatpush1.msra.mxu0 %v796
        %1266 = vmatprep.subr.mxu0 0.0
        %1267 = vmatpush1.msra.mxu0 %v801
        %1268 = vmatprep.subr.mxu0 0.0
        %1269 = vmatpush1.msra.mxu0 %v806
        %1270 = vmatprep.subr.mxu0 0.0
        %1271 = vmatpush1.msra.mxu0 0.0
        %1272 = vmatprep.subr.mxu0 0.0
        %1273 = vmatpush1.msra.mxu0 0.0
        %1274 = vmatprep.subr.mxu0 0.0
        %1275 = vmatpush1.msra.mxu0 0.0
        %1276 = vmatprep.subr.mxu0 0.0
        %1277 = vmatpush1.msra.mxu0 0.0
        %1278 = vmatprep.subr.mxu0 0.0
        %1279 = vmatpush1.msra.mxu0 0.0
        %1280 = vmatprep.subr.mxu0 0.0
        %1281 = vmatpush1.msra.mxu0 0.0
        %1282 = vmatprep.subr.mxu0 0.0
        %1283 = vmatpush1.msra.mxu0 0.0
        %1284 = vmatprep.subr.mxu0 0.0
        %1285 = vmatpush1.msra.mxu0 0.0
        %1286 = vmatprep.subr.mxu0 0.0
        %1287 = vmatpush1.msra.mxu0 0.0
        %1288 = vmatprep.subr.mxu0 0.0
        %1289 = vmatpush1.msra.mxu0 0.0
        %1290 = vmatprep.subr.mxu0 0.0
        %1291 = vmatpush1.msra.mxu0 0.0
        %1292 = vmatprep.subr.mxu0 0.0
        %1293 = vmatpush1.msra.mxu0 0.0
        %1294 = vmatprep.subr.mxu0 0.0
        %1295 = vmatpush1.msra.mxu0 0.0
        %1296 = vmatprep.subr.mxu0 0.0
        %1297 = vmatpush1.msra.mxu0 0.0
        %1298 = vmatprep.subr.mxu0 0.0
        %1299 = vmatpush1.msra.mxu0 0.0
        %1300 = vmatprep.subr.mxu0 0.0
        %1301 = vmatpush1.msra.mxu0 0.0
        %1302 = vmatprep.subr.mxu0 0.0
        %1303 = vmatpush1.msra.mxu0 0.0
        %1304 = vmatprep.subr.mxu0 0.0
        %1305 = vmatpush1.msra.mxu0 0.0
        %1306 = vmatprep.subr.mxu0 0.0
        %1307 = vmatpush1.msra.mxu0 0.0
        %1308 = vmatprep.subr.mxu0 0.0
        %1309 = vmatpush1.msra.mxu0 0.0
        %1310 = vmatprep.subr.mxu0 0.0
        %1311 = vmatpush1.msra.mxu0 0.0
        %1312 = vmatprep.subr.mxu0 0.0
        %1313 = vmatpush1.msra.mxu0 0.0
        %1314 = vmatprep.subr.mxu0 0.0
        %1315 = vmatpush1.msra.mxu0 0.0
        %1316 = vmatprep.subr.mxu0 0.0
        %1317 = vmatpush1.msra.mxu0 0.0
        %1318 = vmatprep.mubr.f32.mxu0 0.0
        %1319 = vmatmul.mubr.f32.gmra.mrb[0].mxu0 %v811
        %v1320 = vpop.f32.mrb[0].mxu0
        %v1321 = vadd.f32 0.0, %v1320
        %v1322 = vpop.f32.mrb[0].mxu0
        %1323 = vmatprep.mubr.f32.mxu0 0.0
        %1324 = vmatmul.mubr.f32.gmra.mrb[0].mxu0 %v814
        %v1325 = vpop.f32.mrb[0].mxu0
        %v1326 = vadd.f32 0.0, %v1325
        %v1327 = vpop.f32.mrb[0].mxu0
        %1328 = vmatprep.mubr.f32.mxu0 0.0
        %1329 = vmatmul.mubr.f32.gmra.mrb[0].mxu0 %v817
        %v1330 = vpop.f32.mrb[0].mxu0
        %v1331 = vadd.f32 0.0, %v1330
        %v1332 = vpop.f32.mrb[0].mxu0
        %1333 = vmatprep.mubr.f32.mxu0 0.0
        %1334 = vmatmul.mubr.f32.gmra.mrb[0].mxu0 %v820
        %v1335 = vpop.f32.mrb[0].mxu0
        %v1336 = vadd.f32 0.0, %v1335
        %v1337 = vpop.f32.mrb[0].mxu0
        %1338 = vmatprep.mubr.f32.mxu0 0.0
        %1339 = vmatmul.mubr.f32.gmra.mrb[0].mxu0 %v823
        %v1340 = vpop.f32.mrb[0].mxu0
        %v1341 = vadd.f32 0.0, %v1340
        %v1342 = vpop.f32.mrb[0].mxu0
        %1343 = vmatprep.mubr.f32.mxu0 0.0
        %1344 = vmatmul.mubr.f32.gmra.mrb[0].mxu0 %v826
        %v1345 = vpop.f32.mrb[0].mxu0
        %v1346 = vadd.f32 0.0, %v1345
        %v1347 = vpop.f32.mrb[0].mxu0
        %1348 = vmatprep.mubr.f32.mxu0 0.0
        %1349 = vmatmul.mubr.f32.gmra.mrb[0].mxu0 %v829
        %v1350 = vpop.f32.mrb[0].mxu0
        %v1351 = vadd.f32 0.0, %v1350
        %v1352 = vpop.f32.mrb[0].mxu0
        %1353 = vmatprep.mubr.f32.mxu0 0.0
        %1354 = vmatmul.mubr.f32.gmra.mrb[0].mxu0 %v832
        %v1355 = vpop.f32.mrb[0].mxu0
        %v1356 = vadd.f32 0.0, %v1355
        %v1357 = vpop.f32.mrb[0].mxu0
        %1358 = vdwg.mxu0
        %v1359 = vmul.f32 %v901, %v901
        %v1360 = vmul.f32 %v906, %v906
        %v1361 = vmul.f32 %v911, %v911
        %v1362 = vmul.f32 %v916, %v916
        %v1363 = vmul.f32 %v921, %v921
        %v1364 = vmul.f32 %v926, %v926
        %v1365 = vmul.f32 %v931, %v931
        %v1366 = vmul.f32 %v936, %v936
        %v1367 = vmul.f32 %v1006, %v1006
        %v1368 = vmul.f32 %v1011, %v1011
        %v1369 = vmul.f32 %v1016, %v1016
        %v1370 = vmul.f32 %v1021, %v1021
        %v1371 = vmul.f32 %v1026, %v1026
        %v1372 = vmul.f32 %v1031, %v1031
        %v1373 = vmul.f32 %v1036, %v1036
        %v1374 = vmul.f32 %v1041, %v1041
        %v1375 = vmul.f32 %v901, %v1006
        %v1376 = vmul.f32 %v906, %v1011
        %v1377 = vmul.f32 %v911, %v1016
        %v1378 = vmul.f32 %v916, %v1021
        %v1379 = vmul.f32 %v921, %v1026
        %v1380 = vmul.f32 %v926, %v1031
        %v1381 = vmul.f32 %v931, %v1036
        %v1382 = vmul.f32 %v936, %v1041
        %v1383 = vsub.f32 %v1111, %v1359
        %v1384 = vsub.f32 %v1116, %v1360
        %v1385 = vsub.f32 %v1121, %v1361
        %v1386 = vsub.f32 %v1126, %v1362
        %v1387 = vsub.f32 %v1131, %v1363
        %v1388 = vsub.f32 %v1136, %v1364
        %v1389 = vsub.f32 %v1141, %v1365
        %v1390 = vsub.f32 %v1146, %v1366
        %v1391 = vsub.f32 %v1216, %v1367
        %v1392 = vsub.f32 %v1221, %v1368
        %v1393 = vsub.f32 %v1226, %v1369
        %v1394 = vsub.f32 %v1231, %v1370
        %v1395 = vsub.f32 %v1236, %v1371
        %v1396 = vsub.f32 %v1241, %v1372
        %v1397 = vsub.f32 %v1246, %v1373
        %v1398 = vsub.f32 %v1251, %v1374
        %v1399 = vsub.f32 %v1321, %v1375
        %v1400 = vsub.f32 %v1326, %v1376
        %v1401 = vsub.f32 %v1331, %v1377
        %v1402 = vsub.f32 %v1336, %v1378
        %v1403 = vsub.f32 %v1341, %v1379
        %v1404 = vsub.f32 %v1346, %v1380
        %v1405 = vsub.f32 %v1351, %v1381
        %v1406 = vsub.f32 %v1356, %v1382
        %v1407 = vmul.f32 %v1375, 2.0
        %v1408 = vmul.f32 %v1376, 2.0
        %v1409 = vmul.f32 %v1377, 2.0
        %v1410 = vmul.f32 %v1378, 2.0
        %v1411 = vmul.f32 %v1379, 2.0
        %v1412 = vmul.f32 %v1380, 2.0
        %v1413 = vmul.f32 %v1381, 2.0
        %v1414 = vmul.f32 %v1382, 2.0
        %v1415 = vadd.f32 %v1407, 0.0001
        %v1416 = vadd.f32 %v1408, 0.0001
        %v1417 = vadd.f32 %v1409, 0.0001
        %v1418 = vadd.f32 %v1410, 0.0001
        %v1419 = vadd.f32 %v1411, 0.0001
        %v1420 = vadd.f32 %v1412, 0.0001
        %v1421 = vadd.f32 %v1413, 0.0001
        %v1422 = vadd.f32 %v1414, 0.0001
        %v1423 = vmul.f32 %v1399, 2.0
        %v1424 = vmul.f32 %v1400, 2.0
        %v1425 = vmul.f32 %v1401, 2.0
        %v1426 = vmul.f32 %v1402, 2.0
        %v1427 = vmul.f32 %v1403, 2.0
        %v1428 = vmul.f32 %v1404, 2.0
        %v1429 = vmul.f32 %v1405, 2.0
        %v1430 = vmul.f32 %v1406, 2.0
        %v1431 = vadd.f32 %v1423, 0.0009
        %v1432 = vadd.f32 %v1424, 0.0009
        %v1433 = vadd.f32 %v1425, 0.0009
        %v1434 = vadd.f32 %v1426, 0.0009
        %v1435 = vadd.f32 %v1427, 0.0009
        %v1436 = vadd.f32 %v1428, 0.0009
        %v1437 = vadd.f32 %v1429, 0.0009
        %v1438 = vadd.f32 %v1430, 0.0009
        %v1439 = vmul.f32 %v1415, %v1431
        %v1440 = vmul.f32 %v1416, %v1432
        %v1441 = vmul.f32 %v1417, %v1433
        %v1442 = vmul.f32 %v1418, %v1434
        %v1443 = vmul.f32 %v1419, %v1435
        %v1444 = vmul.f32 %v1420, %v1436
        %v1445 = vmul.f32 %v1421, %v1437
        %v1446 = vmul.f32 %v1422, %v1438
        %v1447 = vadd.f32 %v1359, %v1367
        %v1448 = vadd.f32 %v1360, %v1368
        %v1449 = vadd.f32 %v1361, %v1369
        %v1450 = vadd.f32 %v1362, %v1370
        %v1451 = vadd.f32 %v1363, %v1371
        %v1452 = vadd.f32 %v1364, %v1372
        %v1453 = vadd.f32 %v1365, %v1373
        %v1454 = vadd.f32 %v1366, %v1374
        %v1455 = vadd.f32 %v1447, 0.0001
        %v1456 = vadd.f32 %v1448, 0.0001
        %v1457 = vadd.f32 %v1449, 0.0001
        %v1458 = vadd.f32 %v1450, 0.0001
        %v1459 = vadd.f32 %v1451, 0.0001
        %v1460 = vadd.f32 %v1452, 0.0001
        %v1461 = vadd.f32 %v1453, 0.0001
        %v1462 = vadd.f32 %v1454, 0.0001
        %v1463 = vadd.f32 %v1383, %v1391
        %v1464 = vadd.f32 %v1384, %v1392
        %v1465 = vadd.f32 %v1385, %v1393
        %v1466 = vadd.f32 %v1386, %v1394
        %v1467 = vadd.f32 %v1387, %v1395
        %v1468 = vadd.f32 %v1388, %v1396
        %v1469 = vadd.f32 %v1389, %v1397
        %v1470 = vadd.f32 %v1390, %v1398
        %v1471 = vadd.f32 %v1463, 0.0009
        %v1472 = vadd.f32 %v1464, 0.0009
        %v1473 = vadd.f32 %v1465, 0.0009
        %v1474 = vadd.f32 %v1466, 0.0009
        %v1475 = vadd.f32 %v1467, 0.0009
        %v1476 = vadd.f32 %v1468, 0.0009
        %v1477 = vadd.f32 %v1469, 0.0009
        %v1478 = vadd.f32 %v1470, 0.0009
        %v1479 = vmul.f32 %v1455, %v1471
        %v1480 = vmul.f32 %v1456, %v1472
        %v1481 = vmul.f32 %v1457, %v1473
        %v1482 = vmul.f32 %v1458, %v1474
        %v1483 = vmul.f32 %v1459, %v1475
        %v1484 = vmul.f32 %v1460, %v1476
        %v1485 = vmul.f32 %v1461, %v1477
        %v1486 = vmul.f32 %v1462, %v1478
        %v1487 = vrcp.pop %v1479
        %v1488 = vmul.f32 %v1439, %v1487
        %v1489 = vrcp.pop %v1480
        %v1490 = vmul.f32 %v1440, %v1489
        %v1491 = vrcp.pop %v1481
        %v1492 = vmul.f32 %v1441, %v1491
        %v1493 = vrcp.pop %v1482
        %v1494 = vmul.f32 %v1442, %v1493
        %v1495 = vrcp.pop %v1483
        %v1496 = vmul.f32 %v1443, %v1495
        %v1497 = vrcp.pop %v1484
        %v1498 = vmul.f32 %v1444, %v1497
        %v1499 = vrcp.pop %v1485
        %v1500 = vmul.f32 %v1445, %v1499
        %v1501 = vrcp.pop %v1486
        %v1502 = vmul.f32 %v1446, %v1501
        %v1503 = vsel %vm305, %v1488, 0.0
        %v1504 = vsel %vm305, %v1490, 0.0
        %v1505 = vadd.f32 %v1503, %v1504
        %v1506 = vsel %vm305, %v1492, 0.0
        %v1507 = vadd.f32 %v1505, %v1506
        %v1508 = vsel %vm305, %v1494, 0.0
        %v1509 = vadd.f32 %v1507, %v1508
        %v1510 = vsel %vm305, %v1496, 0.0
        %v1511 = vadd.f32 %v1509, %v1510
        %v1512 = vsel %vm305, %v1498, 0.0
        %v1513 = vadd.f32 %v1511, %v1512
        %v1514 = vsel %vm305, %v1500, 0.0
        %v1515 = vadd.f32 %v1513, %v1514
        %v1516 = vsel %vm305, %v1502, 0.0
        %v1517 = vadd.f32 %v1515, %v1516
        %1518 = vadd.xlane.f32.xlu0 %v1517
        %v1519 = vpop.xlane.xlu0 %1518
        %v1520 = vrot.slane %v1519, 4
        %v1521 = vadd.f32 %v1519, %v1520
        %v1522 = vrot.slane %v1521, 2
        %v1523 = vadd.f32 %v1521, %v1522
        %v1524 = vrot.slane %v1523, 1
        %v1525 = vadd.f32 %v1523, %v1524
        %s1526 = vtos %v1525
        %v1527 = vstv %s1526
        %v1528 = vadd.f32 %v1527, 0.0
        %1529 = vst [vmem:[%s286] sm:$0xff] %v1528
        %s1530 = sand.u32 %s127, 1
        %s1531 = scalar_lea.sflag [#allocation5], %s1530
        %s1532 = sand.u32 %s127, 1
        %s1533 = smul.addr %s1532, 8
        %s1534 = scalar_lea.vmem [#allocation11], %s1533
        // Predicated region
        $region53: #{tpu_custom_call.1} parent=35 // pred_check
          %p1535 = pneg %p137
        $region54: #{tpu_custom_call.1} parent=35 // pred_check_branch
          %1537 = sbr.rel (%p1535) target = $region56
        $region55: #{tpu_custom_call.1} parent=35 // pred_region
          %s1539 = ssub.s32 128, 128
          %1540 = vsyncadd %s1531, %s1539
          %s1541 = smul.addr %s25, 128
          %s1542 = scalar_lea.hbm %s4, %s1541
          %s1544 = sshll.u32 %s1534, 4
          %s1545 = int_to_ptr.vmem [resolvable:$true] %s1544
          %1547 = dma.vmem_to_hbm [thread:$0]  %s1545, 128, %s1542, %s1531
        $region56: #{tpu_custom_call.1} parent=35 // pred_fallthru
          _
      $region36: #{tpu_custom_call.1} parent=5 // pred_fallthru
        _
      %p1548 = scmp.le.s32.totalorder 2, %s20
      // Predicated region
      $region57: #{tpu_custom_call.1} parent=5 // pred_check
        %p1549 = pneg %p1548
      $region58: #{tpu_custom_call.1} parent=5 // pred_check_branch
        %1551 = sbr.rel (%p1549) target = $region60
      $region59: #{tpu_custom_call.1} parent=5 // pred_region
        %s1552 = ssub.s32 %s20, 2
        // Predicated region
        $region61: #{tpu_custom_call.1} parent=59 // pred_check
          %p1553 = pneg %p143
        $region62: #{tpu_custom_call.1} parent=59 // pred_check_branch
          %1555 = sbr.rel (%p1553) target = $region64
        $region63: #{tpu_custom_call.1} parent=59 // pred_region
          %s1556 = sand.u32 %s128, 1
          %s1557 = scalar_lea.sflag [#allocation5], %s1556
          %s1558 = sand.u32 %s128, 1
          %s1559 = smul.addr %s1558, 8
          %s1560 = scalar_lea.vmem [#allocation11], %s1559
          %1561 = dma.done %s1557, 128
        $region64: #{tpu_custom_call.1} parent=59 // pred_fallthru
          _
      $region60: #{tpu_custom_call.1} parent=5 // pred_fallthru
        _
    $region6: #{tpu_custom_call.1} parent=1 // loop_footer
      %s24 = sadd.s32 1, %s20
    $region7: #{tpu_custom_call.1} parent=1 // loop_footer_branch
      %19 = sbr.rel target = $region3
    $region8: #{tpu_custom_call.1} parent=1 // loop_exit
      _
    %1562 = vsyncpa [#allocation4], 1
    %s1563 = scalar_lea.sflag [#allocation4], 1
    %1564 = vsyncpa %s1563, 1
    %1565 = vsyncpa [#allocation7], 1
    %s1566 = scalar_lea.sflag [#allocation7], 1
    %1567 = vsyncpa %s1566, 1
    %1568 = vsyncpa [#allocation10], 1
    %1569 = vsyncpa [#allocation5], 1
    %s1570 = scalar_lea.sflag [#allocation5], 1
    %1571 = vsyncpa %s1570, 1

</llo_original>
